<compile_context>
chip_gen: v7x
topology: tpu7x:2x2x1
jax: 0.10.0
libtpu: 0.0.40
codegen_flags: <defaults>
</compile_context>

<pallas_src>
import functools
import math

import jax
import jax.numpy as jnp
import numpy as np
from jax.experimental import pallas as pl
from jax.experimental.pallas import tpu as pltpu

_BN_EPS = 1e-5


# ------------------------------ Pallas kernel -------------------------------


def _mish(x):
    # mish(x) = x * tanh(softplus(x));  tanh(softplus(x)) = ((1+e)^2-1)/((1+e)^2+1)
    # 1 exp + 1 approx reciprocal on the EUP; guard large x (mish(x) ~= x there).
    e = jnp.exp(jnp.minimum(x, 20.0))
    w = (1.0 + e) * (1.0 + e)
    t = (w - 1.0) * pl.reciprocal(w + 1.0, approx=True)
    return jnp.where(x > 20.0, x, x * t)


def _taps(y, pix, col, d, h, w, tm):
    """Build (9*C, tm) im2col taps of y for a 'same' 3x3 conv with dilation d.

    y   : (C, tm)  activation; the tile holds whole h*w-pixel images.
    pix : (1, tm)  int32 flat pixel index within its image.
    col : (1, tm)  int32 column index within its row.

    tap[(kh,kw)][p] = y[p + (kh*d)*w + kw*d] when the source pixel is inside
    the image, else 0.  Because tiles hold whole images, the lane-roll wrap
    only affects lanes that the masks zero out anyway.
    """
    img = h * w
    parts = []
    for kh in (-1, 0, 1):
        for kw in (-1, 0, 1):
            dh, dw = kh * d, kw * d
            off = dh * w + dw
            if off == 0:
                parts.append(y)
                continue
            # jnp.roll semantics: out[p] = in[p - shift]  ->  shift = -off.
            shifted = pltpu.roll(y, (-off) % tm, axis=1)
            valid = ((pix >= -dh * w) & (pix < img - dh * w) &
                     (col >= -dw) & (col < w - dw))
            parts.append(shifted * valid.astype(y.dtype))
    return jnp.concatenate(parts, axis=0)          # (9*C, tm), tap-major


def _conv_block_kernel(pix_ref, col_ref, x_ref,
                       wi_ref, bi_ref, s1_ref, t1_ref,
                       w01_ref, b01_ref, w2_ref, b2_ref,
                       wf_ref, sf_ref, bf_ref, o_ref, *, h, w):
    tm = x_ref.shape[-1]
    pix = pix_ref[...]
    col = col_ref[...]

    # init 1x1 conv (+bias); raw output is the first chunk of the concat.
    x0 = jnp.dot(wi_ref[...], x_ref[...],
                 preferred_element_type=jnp.float32) + bi_ref[...]
    # bn1 (folded scale/shift) + Mish -> input of the three 3x3 convs.
    y1 = _mish(x0 * s1_ref[...] + t1_ref[...])

    taps1 = _taps(y1, pix, col, 1, h, w, tm)       # (9*C, tm) dilation 1
    taps3 = _taps(y1, pix, col, 3, h, w, tm)       # (9*C, tm) dilation 3

    # rconv0 + rconv1 as one stacked matmul; rconv2 separately.
    r01 = jnp.dot(w01_ref[...], taps1,
                  preferred_element_type=jnp.float32) + b01_ref[...]
    r2 = jnp.dot(w2_ref[...], taps3,
                 preferred_element_type=jnp.float32) + b2_ref[...]

    cat = jnp.concatenate([x0, r01, r2], axis=0)   # (4*C, tm)
    z = jnp.dot(wf_ref[...], cat, preferred_element_type=jnp.float32)
    o_ref[...] = _mish(z * sf_ref[...] + bf_ref[...])


# ------------------------------ pallas_call glue -----------------------------


def _pick_tile(m, img, cap=2048):
    """Lane tile: multiple of img (whole images) and of 128 (lane alignment)."""
    base = img * 128 // math.gcd(img, 128)         # lcm(img, 128)
    if m % base != 0:
        return m                                    # single untiled block
    tm = base
    while tm * 2 <= cap and m % (tm * 2) == 0 and m // (tm * 2) >= 2:
        tm *= 2
    return tm


def _conv_block_call(pix, col, x_cm, wi, bi, s1, t1,
                     w01, b01, w2, b2, wf, sf, bf, *, h, w):
    cin, m = x_cm.shape
    cout = wi.shape[0]
    k9 = 9 * cout
    tm = _pick_tile(m, h * w)
    tile = lambda i: (0, i)
    const = lambda i: (0, 0)
    cost = pl.CostEstimate(
        flops=2 * m * (cin * cout + 3 * cout * k9 + 4 * cout * cout)
        + 20 * m * cout,
        transcendentals=4 * m * cout,
        bytes_accessed=4 * m * (cin + cout + 2))
    kernel = functools.partial(_conv_block_kernel, h=h, w=w)
    return pl.pallas_call(
        kernel,
        grid=(m // tm,),
        in_specs=[pl.BlockSpec((1, tm), tile),            # pix-in-image
                  pl.BlockSpec((1, tm), tile),            # col-in-row
                  pl.BlockSpec((cin, tm), tile),          # x
                  pl.BlockSpec((cout, cin), const),       # init 1x1 weight
                  pl.BlockSpec((cout, 1), const),         # init bias
                  pl.BlockSpec((cout, 1), const),         # bn1 scale
                  pl.BlockSpec((cout, 1), const),         # bn1 shift
                  pl.BlockSpec((2 * cout, k9), const),    # rconv0|1 weights
                  pl.BlockSpec((2 * cout, 1), const),     # rconv0|1 biases
                  pl.BlockSpec((cout, k9), const),        # rconv2 weight
                  pl.BlockSpec((cout, 1), const),         # rconv2 bias
                  pl.BlockSpec((cout, 4 * cout), const),  # final 1x1 weight
                  pl.BlockSpec((cout, 1), const),         # bn2+final scale
                  pl.BlockSpec((cout, 1), const)],        # bn2+final shift
        out_specs=pl.BlockSpec((cout, tm), tile),
        out_shape=jax.ShapeDtypeStruct((cout, m), jnp.float32),
        compiler_params=pltpu.CompilerParams(
            dimension_semantics=("parallel",)),
        cost_estimate=cost,
    )(pix, col, x_cm, wi, bi, s1, t1, w01, b01, w2, b2, wf, sf, bf)


# --------------------------------- JAX glue ----------------------------------


def _flat_w3(wc):
    """PyTorch (Cout, Cin, 3, 3) -> (Cout, 9*Cin) matching _taps ordering."""
    return jnp.transpose(wc, (0, 2, 3, 1)).reshape(wc.shape[0], -1)


def conv_block_forward(params, x_nchw):
    n, cin, h, w = x_nchw.shape
    m = n * h * w
    img = h * w
    cout = params["init_w"].shape[0]
    x_cm = jnp.transpose(x_nchw, (1, 0, 2, 3)).reshape(cin, m).astype(jnp.float32)

    # Fold BatchNorm (eval mode) + conv biases into per-channel scale/shift.
    s1 = params["bn1_gamma"] / jnp.sqrt(params["bn1_var"] + _BN_EPS)
    t1 = params["bn1_beta"] - params["bn1_mean"] * s1
    s2 = params["bn2_gamma"] / jnp.sqrt(params["bn2_var"] + _BN_EPS)
    t2 = (params["final_b"] - params["bn2_mean"]) * s2 + params["bn2_beta"]

    wi = params["init_w"].reshape(cout, cin)
    w01 = jnp.concatenate([_flat_w3(params["rconv_w"][0]),
                           _flat_w3(params["rconv_w"][1])], axis=0)
    b01 = jnp.concatenate([params["rconv_b"][0],
                           params["rconv_b"][1]], axis=0)[:, None]
    w2 = _flat_w3(params["rconv_w"][2])
    b2 = params["rconv_b"][2][:, None]
    wf = params["final_w"].reshape(cout, 4 * cout)

    # Per-lane spatial coordinates driving the in-kernel 3x3 boundary masks.
    pix = (jnp.arange(m, dtype=jnp.int32) % img)[None, :]
    col = pix % w

    out_cm = _conv_block_call(pix, col, x_cm, wi, params["init_b"][:, None],
                              s1[:, None], t1[:, None], w01, b01, w2, b2,
                              wf, s2[:, None], t2[:, None], h=h, w=w)
    return jnp.transpose(out_cm.reshape(cout, n, h, w), (1, 0, 2, 3))  # NCHW


# ------------------------------ synthetic params -----------------------------


def init_params(key, in_channel, out_channel):
    ks = jax.random.split(key, 18)

    def uni(k, shape, fan_in):
        b = 1.0 / np.sqrt(fan_in)
        return jax.random.uniform(k, shape, jnp.float32, -b, b)

    return {
        "init_w": uni(ks[0], (out_channel, in_channel, 1, 1), in_channel),
        "init_b": uni(ks[1], (out_channel,), in_channel),
        "rconv_w": [uni(ks[2 + i], (out_channel, out_channel, 3, 3),
                        9 * out_channel) for i in range(3)],
        "rconv_b": [uni(ks[5 + i], (out_channel,), 9 * out_channel)
                    for i in range(3)],
        "final_w": uni(ks[8], (out_channel, 4 * out_channel, 1, 1),
                       4 * out_channel),
        "final_b": uni(ks[9], (out_channel,), 4 * out_channel),
        "bn1_gamma": 1.0 + 0.1 * jax.random.normal(ks[10], (out_channel,)),
        "bn1_beta": 0.1 * jax.random.normal(ks[11], (out_channel,)),
        "bn1_mean": 0.1 * jax.random.normal(ks[12], (out_channel,)),
        "bn1_var": jax.random.uniform(ks[13], (out_channel,), jnp.float32, 0.5, 1.5),
        "bn2_gamma": 1.0 + 0.1 * jax.random.normal(ks[14], (out_channel,)),
        "bn2_beta": 0.1 * jax.random.normal(ks[15], (out_channel,)),
        "bn2_mean": 0.1 * jax.random.normal(ks[16], (out_channel,)),
        "bn2_var": jax.random.uniform(ks[17], (out_channel,), jnp.float32, 0.5, 1.5),
    }


# ------------------------------ pure-JAX reference ---------------------------


def _mish_ref(x):
    return x * jnp.tanh(jax.nn.softplus(x))


def _bn_ref(v, g, b, mean, var):
    inv = g / jnp.sqrt(var + _BN_EPS)
    return ((v - mean[None, :, None, None]) * inv[None, :, None, None]
            + b[None, :, None, None])


def _conv_ref(v, w, b, d=1):
    pad = d * (w.shape[2] // 2)
    out = jax.lax.conv_general_dilated(
        v, w, window_strides=(1, 1), padding=[(pad, pad), (pad, pad)],
        rhs_dilation=(d, d), dimension_numbers=("NCHW", "OIHW", "NCHW"))
    return out + b[None, :, None, None]


def ref_forward(params, x):
    outs = [_conv_ref(x, params["init_w"], params["init_b"])]
    h = _mish_ref(_bn_ref(outs[0], params["bn1_gamma"], params["bn1_beta"],
                          params["bn1_mean"], params["bn1_var"]))
    for i, d in enumerate((1, 1, 3)):
        outs.append(_conv_ref(h, params["rconv_w"][i], params["rconv_b"][i], d))
    cat = jnp.concatenate(outs, axis=1)
    z = _conv_ref(cat, params["final_w"], params["final_b"])
    z = _bn_ref(z, params["bn2_gamma"], params["bn2_beta"],
                params["bn2_mean"], params["bn2_var"])
    return _mish_ref(z)


# ------------------------------------ main -----------------------------------

if __name__ == "__main__":
    key = jax.random.PRNGKey(0)
    kp, kx = jax.random.split(key)

    in_channel, out_channel = 4, 8
    params = init_params(kp, in_channel, out_channel)
    x = jax.random.normal(kx, (2, in_channel, 16, 16), jnp.float32)

    out = jax.block_until_ready(jax.jit(conv_block_forward)(params, x))
    assert out.shape == (2, out_channel, 16, 16)

    ref = jax.block_until_ready(jax.jit(ref_forward)(params, x))
    np.testing.assert_allclose(np.asarray(out), np.asarray(ref),
                               rtol=2e-2, atol=2e-2)
    print("KERNEL_OK")
</pallas_src>

<mosaic_0001>
module attributes {stable_mosaic.version = 11 : i64} {
  func.func @_conv_block_kernel(%arg0: i32, %arg1: memref<1x256xi32, #tpu.memory_space<vmem>>, %arg2: memref<1x256xi32, #tpu.memory_space<vmem>>, %arg3: memref<4x256xf32, #tpu.memory_space<vmem>>, %arg4: memref<8x4xf32, #tpu.memory_space<vmem>>, %arg5: memref<8x1xf32, #tpu.memory_space<vmem>>, %arg6: memref<8x1xf32, #tpu.memory_space<vmem>>, %arg7: memref<8x1xf32, #tpu.memory_space<vmem>>, %arg8: memref<16x72xf32, #tpu.memory_space<vmem>>, %arg9: memref<16x1xf32, #tpu.memory_space<vmem>>, %arg10: memref<8x72xf32, #tpu.memory_space<vmem>>, %arg11: memref<8x1xf32, #tpu.memory_space<vmem>>, %arg12: memref<8x32xf32, #tpu.memory_space<vmem>>, %arg13: memref<8x1xf32, #tpu.memory_space<vmem>>, %arg14: memref<8x1xf32, #tpu.memory_space<vmem>>, %arg15: memref<8x256xf32, #tpu.memory_space<vmem>>) attributes {dimension_semantics = [#tpu.dimension_semantics<parallel>], iteration_bounds = array<i64: 2>, scalar_prefetch = 0 : i64, scratch_operands = 0 : i64, tpu.core_type = #tpu.core_type<tc>, window_params = [{transform_indices = @transform_0, window_bounds = array<i64: 1, 256>}, {transform_indices = @transform_1, window_bounds = array<i64: 1, 256>}, {transform_indices = @transform_2, window_bounds = array<i64: 4, 256>}, {pipeline_mode = #tpu.pipeline_mode<synchronous>, transform_indices = @transform_3, window_bounds = array<i64: 8, 4>}, {pipeline_mode = #tpu.pipeline_mode<synchronous>, transform_indices = @transform_4, window_bounds = array<i64: 8, 1>}, {pipeline_mode = #tpu.pipeline_mode<synchronous>, transform_indices = @transform_5, window_bounds = array<i64: 8, 1>}, {pipeline_mode = #tpu.pipeline_mode<synchronous>, transform_indices = @transform_6, window_bounds = array<i64: 8, 1>}, {pipeline_mode = #tpu.pipeline_mode<synchronous>, transform_indices = @transform_7, window_bounds = array<i64: 16, 72>}, {pipeline_mode = #tpu.pipeline_mode<synchronous>, transform_indices = @transform_8, window_bounds = array<i64: 16, 1>}, {pipeline_mode = #tpu.pipeline_mode<synchronous>, transform_indices = @transform_9, window_bounds = array<i64: 8, 72>}, {pipeline_mode = #tpu.pipeline_mode<synchronous>, transform_indices = @transform_10, window_bounds = array<i64: 8, 1>}, {pipeline_mode = #tpu.pipeline_mode<synchronous>, transform_indices = @transform_11, window_bounds = array<i64: 8, 32>}, {pipeline_mode = #tpu.pipeline_mode<synchronous>, transform_indices = @transform_12, window_bounds = array<i64: 8, 1>}, {pipeline_mode = #tpu.pipeline_mode<synchronous>, transform_indices = @transform_13, window_bounds = array<i64: 8, 1>}, {transform_indices = @transform_14, window_bounds = array<i64: 8, 256>}]} {
    %c0 = arith.constant 0 : index
    %c0_0 = arith.constant 0 : index
    %0 = vector.load %arg1[%c0, %c0_0] : memref<1x256xi32, #tpu.memory_space<vmem>>, vector<1x256xi32>
    %c0_1 = arith.constant 0 : index
    %c0_2 = arith.constant 0 : index
    %1 = vector.load %arg2[%c0_1, %c0_2] : memref<1x256xi32, #tpu.memory_space<vmem>>, vector<1x256xi32>
    %c0_3 = arith.constant 0 : index
    %c0_4 = arith.constant 0 : index
    %2 = vector.load %arg4[%c0_3, %c0_4] : memref<8x4xf32, #tpu.memory_space<vmem>>, vector<8x4xf32>
    %c0_5 = arith.constant 0 : index
    %c0_6 = arith.constant 0 : index
    %3 = vector.load %arg3[%c0_5, %c0_6] : memref<4x256xf32, #tpu.memory_space<vmem>>, vector<4x256xf32>
    %cst = arith.constant dense<0.000000e+00> : vector<8x256xf32>
    %4 = tpu.matmul %2, %3, %cst {dimension_numbers = #tpu.dot_dimension_numbers<[1], [0], [0], [1], [0, 0, 1, 1], [], []>} : vector<8x4xf32>, vector<4x256xf32>, vector<8x256xf32> -> vector<8x256xf32>
    %c0_7 = arith.constant 0 : index
    %c0_8 = arith.constant 0 : index
    %5 = vector.load %arg5[%c0_7, %c0_8] : memref<8x1xf32, #tpu.memory_space<vmem>>, vector<8x1xf32>
    %6 = vector.broadcast %5 : vector<8x1xf32> to vector<8x256xf32>
    %7 = arith.addf %4, %6 : vector<8x256xf32>
    %c0_9 = arith.constant 0 : index
    %c0_10 = arith.constant 0 : index
    %8 = vector.load %arg6[%c0_9, %c0_10] : memref<8x1xf32, #tpu.memory_space<vmem>>, vector<8x1xf32>
    %9 = vector.broadcast %8 : vector<8x1xf32> to vector<8x256xf32>
    %10 = arith.mulf %7, %9 : vector<8x256xf32>
    %c0_11 = arith.constant 0 : index
    %c0_12 = arith.constant 0 : index
    %11 = vector.load %arg7[%c0_11, %c0_12] : memref<8x1xf32, #tpu.memory_space<vmem>>, vector<8x1xf32>
    %12 = vector.broadcast %11 : vector<8x1xf32> to vector<8x256xf32>
    %13 = arith.addf %10, %12 : vector<8x256xf32>
    %cst_13 = arith.constant 2.000000e+01 : f32
    %14 = vector.broadcast %cst_13 : f32 to vector<8x256xf32>
    %15 = arith.minimumf %13, %14 : vector<8x256xf32>
    %16 = math.exp %15 : vector<8x256xf32>
    %cst_14 = arith.constant 1.000000e+00 : f32
    %17 = vector.broadcast %cst_14 : f32 to vector<8x256xf32>
    %18 = arith.addf %17, %16 : vector<8x256xf32>
    %cst_15 = arith.constant 1.000000e+00 : f32
    %19 = vector.broadcast %cst_15 : f32 to vector<8x256xf32>
    %20 = arith.addf %19, %16 : vector<8x256xf32>
    %21 = arith.mulf %18, %20 : vector<8x256xf32>
    %cst_16 = arith.constant 1.000000e+00 : f32
    %22 = vector.broadcast %cst_16 : f32 to vector<8x256xf32>
    %23 = arith.subf %21, %22 : vector<8x256xf32>
    %cst_17 = arith.constant 1.000000e+00 : f32
    %24 = vector.broadcast %cst_17 : f32 to vector<8x256xf32>
    %25 = arith.addf %21, %24 : vector<8x256xf32>
    %26 = tpu.reciprocal %25 {approx = true} : vector<8x256xf32> -> vector<8x256xf32>
    %27 = arith.mulf %23, %26 : vector<8x256xf32>
    %cst_18 = arith.constant 2.000000e+01 : f32
    %28 = vector.broadcast %cst_18 : f32 to vector<8x256xf32>
    %29 = arith.cmpf ogt, %13, %28 : vector<8x256xf32>
    %30 = arith.mulf %13, %27 : vector<8x256xf32>
    %31 = arith.select %29, %13, %30 : vector<8x256xi1>, vector<8x256xf32>
    %c17_i32 = arith.constant 17 : i32
    %32 = tpu.dynamic_rotate %31 by %c17_i32 dim 1 : vector<8x256xf32>, i32 -> vector<8x256xf32>
    %c16_i32 = arith.constant 16 : i32
    %33 = vector.broadcast %c16_i32 : i32 to vector<1x256xi32>
    %34 = arith.cmpi sge, %0, %33 : vector<1x256xi32>
    %c272_i32 = arith.constant 272 : i32
    %35 = vector.broadcast %c272_i32 : i32 to vector<1x256xi32>
    %36 = arith.cmpi slt, %0, %35 : vector<1x256xi32>
    %37 = arith.andi %34, %36 : vector<1x256xi1>
    %c1_i32 = arith.constant 1 : i32
    %38 = vector.broadcast %c1_i32 : i32 to vector<1x256xi32>
    %39 = arith.cmpi sge, %1, %38 : vector<1x256xi32>
    %40 = arith.andi %37, %39 : vector<1x256xi1>
    %c17_i32_19 = arith.constant 17 : i32
    %41 = vector.broadcast %c17_i32_19 : i32 to vector<1x256xi32>
    %42 = arith.cmpi slt, %1, %41 : vector<1x256xi32>
    %43 = arith.andi %40, %42 : vector<1x256xi1>
    %44 = arith.extui %43 : vector<1x256xi1> to vector<1x256xi32>
    %45 = arith.sitofp %44 : vector<1x256xi32> to vector<1x256xf32>
    %46 = vector.broadcast %45 : vector<1x256xf32> to vector<8x256xf32>
    %47 = arith.mulf %32, %46 : vector<8x256xf32>
    %c16_i32_20 = arith.constant 16 : i32
    %48 = tpu.dynamic_rotate %31 by %c16_i32_20 dim 1 : vector<8x256xf32>, i32 -> vector<8x256xf32>
    %c16_i32_21 = arith.constant 16 : i32
    %49 = vector.broadcast %c16_i32_21 : i32 to vector<1x256xi32>
    %50 = arith.cmpi sge, %0, %49 : vector<1x256xi32>
    %c272_i32_22 = arith.constant 272 : i32
    %51 = vector.broadcast %c272_i32_22 : i32 to vector<1x256xi32>
    %52 = arith.cmpi slt, %0, %51 : vector<1x256xi32>
    %53 = arith.andi %50, %52 : vector<1x256xi1>
    %c0_i32 = arith.constant 0 : i32
    %54 = vector.broadcast %c0_i32 : i32 to vector<1x256xi32>
    %55 = arith.cmpi sge, %1, %54 : vector<1x256xi32>
    %56 = arith.andi %53, %55 : vector<1x256xi1>
    %c16_i32_23 = arith.constant 16 : i32
    %57 = vector.broadcast %c16_i32_23 : i32 to vector<1x256xi32>
    %58 = arith.cmpi slt, %1, %57 : vector<1x256xi32>
    %59 = arith.andi %56, %58 : vector<1x256xi1>
    %60 = arith.extui %59 : vector<1x256xi1> to vector<1x256xi32>
    %61 = arith.sitofp %60 : vector<1x256xi32> to vector<1x256xf32>
    %62 = vector.broadcast %61 : vector<1x256xf32> to vector<8x256xf32>
    %63 = arith.mulf %48, %62 : vector<8x256xf32>
    %c15_i32 = arith.constant 15 : i32
    %64 = tpu.dynamic_rotate %31 by %c15_i32 dim 1 : vector<8x256xf32>, i32 -> vector<8x256xf32>
    %c16_i32_24 = arith.constant 16 : i32
    %65 = vector.broadcast %c16_i32_24 : i32 to vector<1x256xi32>
    %66 = arith.cmpi sge, %0, %65 : vector<1x256xi32>
    %c272_i32_25 = arith.constant 272 : i32
    %67 = vector.broadcast %c272_i32_25 : i32 to vector<1x256xi32>
    %68 = arith.cmpi slt, %0, %67 : vector<1x256xi32>
    %69 = arith.andi %66, %68 : vector<1x256xi1>
    %c-1_i32 = arith.constant -1 : i32
    %70 = vector.broadcast %c-1_i32 : i32 to vector<1x256xi32>
    %71 = arith.cmpi sge, %1, %70 : vector<1x256xi32>
    %72 = arith.andi %69, %71 : vector<1x256xi1>
    %c15_i32_26 = arith.constant 15 : i32
    %73 = vector.broadcast %c15_i32_26 : i32 to vector<1x256xi32>
    %74 = arith.cmpi slt, %1, %73 : vector<1x256xi32>
    %75 = arith.andi %72, %74 : vector<1x256xi1>
    %76 = arith.extui %75 : vector<1x256xi1> to vector<1x256xi32>
    %77 = arith.sitofp %76 : vector<1x256xi32> to vector<1x256xf32>
    %78 = vector.broadcast %77 : vector<1x256xf32> to vector<8x256xf32>
    %79 = arith.mulf %64, %78 : vector<8x256xf32>
    %c1_i32_27 = arith.constant 1 : i32
    %80 = tpu.dynamic_rotate %31 by %c1_i32_27 dim 1 : vector<8x256xf32>, i32 -> vector<8x256xf32>
    %c0_i32_28 = arith.constant 0 : i32
    %81 = vector.broadcast %c0_i32_28 : i32 to vector<1x256xi32>
    %82 = arith.cmpi sge, %0, %81 : vector<1x256xi32>
    %c256_i32 = arith.constant 256 : i32
    %83 = vector.broadcast %c256_i32 : i32 to vector<1x256xi32>
    %84 = arith.cmpi slt, %0, %83 : vector<1x256xi32>
    %85 = arith.andi %82, %84 : vector<1x256xi1>
    %c1_i32_29 = arith.constant 1 : i32
    %86 = vector.broadcast %c1_i32_29 : i32 to vector<1x256xi32>
    %87 = arith.cmpi sge, %1, %86 : vector<1x256xi32>
    %88 = arith.andi %85, %87 : vector<1x256xi1>
    %c17_i32_30 = arith.constant 17 : i32
    %89 = vector.broadcast %c17_i32_30 : i32 to vector<1x256xi32>
    %90 = arith.cmpi slt, %1, %89 : vector<1x256xi32>
    %91 = arith.andi %88, %90 : vector<1x256xi1>
    %92 = arith.extui %91 : vector<1x256xi1> to vector<1x256xi32>
    %93 = arith.sitofp %92 : vector<1x256xi32> to vector<1x256xf32>
    %94 = vector.broadcast %93 : vector<1x256xf32> to vector<8x256xf32>
    %95 = arith.mulf %80, %94 : vector<8x256xf32>
    %c255_i32 = arith.constant 255 : i32
    %96 = tpu.dynamic_rotate %31 by %c255_i32 dim 1 : vector<8x256xf32>, i32 -> vector<8x256xf32>
    %c0_i32_31 = arith.constant 0 : i32
    %97 = vector.broadcast %c0_i32_31 : i32 to vector<1x256xi32>
    %98 = arith.cmpi sge, %0, %97 : vector<1x256xi32>
    %c256_i32_32 = arith.constant 256 : i32
    %99 = vector.broadcast %c256_i32_32 : i32 to vector<1x256xi32>
    %100 = arith.cmpi slt, %0, %99 : vector<1x256xi32>
    %101 = arith.andi %98, %100 : vector<1x256xi1>
    %c-1_i32_33 = arith.constant -1 : i32
    %102 = vector.broadcast %c-1_i32_33 : i32 to vector<1x256xi32>
    %103 = arith.cmpi sge, %1, %102 : vector<1x256xi32>
    %104 = arith.andi %101, %103 : vector<1x256xi1>
    %c15_i32_34 = arith.constant 15 : i32
    %105 = vector.broadcast %c15_i32_34 : i32 to vector<1x256xi32>
    %106 = arith.cmpi slt, %1, %105 : vector<1x256xi32>
    %107 = arith.andi %104, %106 : vector<1x256xi1>
    %108 = arith.extui %107 : vector<1x256xi1> to vector<1x256xi32>
    %109 = arith.sitofp %108 : vector<1x256xi32> to vector<1x256xf32>
    %110 = vector.broadcast %109 : vector<1x256xf32> to vector<8x256xf32>
    %111 = arith.mulf %96, %110 : vector<8x256xf32>
    %c241_i32 = arith.constant 241 : i32
    %112 = tpu.dynamic_rotate %31 by %c241_i32 dim 1 : vector<8x256xf32>, i32 -> vector<8x256xf32>
    %c-16_i32 = arith.constant -16 : i32
    %113 = vector.broadcast %c-16_i32 : i32 to vector<1x256xi32>
    %114 = arith.cmpi sge, %0, %113 : vector<1x256xi32>
    %c240_i32 = arith.constant 240 : i32
    %115 = vector.broadcast %c240_i32 : i32 to vector<1x256xi32>
    %116 = arith.cmpi slt, %0, %115 : vector<1x256xi32>
    %117 = arith.andi %114, %116 : vector<1x256xi1>
    %c1_i32_35 = arith.constant 1 : i32
    %118 = vector.broadcast %c1_i32_35 : i32 to vector<1x256xi32>
    %119 = arith.cmpi sge, %1, %118 : vector<1x256xi32>
    %120 = arith.andi %117, %119 : vector<1x256xi1>
    %c17_i32_36 = arith.constant 17 : i32
    %121 = vector.broadcast %c17_i32_36 : i32 to vector<1x256xi32>
    %122 = arith.cmpi slt, %1, %121 : vector<1x256xi32>
    %123 = arith.andi %120, %122 : vector<1x256xi1>
    %124 = arith.extui %123 : vector<1x256xi1> to vector<1x256xi32>
    %125 = arith.sitofp %124 : vector<1x256xi32> to vector<1x256xf32>
    %126 = vector.broadcast %125 : vector<1x256xf32> to vector<8x256xf32>
    %127 = arith.mulf %112, %126 : vector<8x256xf32>
    %c240_i32_37 = arith.constant 240 : i32
    %128 = tpu.dynamic_rotate %31 by %c240_i32_37 dim 1 : vector<8x256xf32>, i32 -> vector<8x256xf32>
    %c-16_i32_38 = arith.constant -16 : i32
    %129 = vector.broadcast %c-16_i32_38 : i32 to vector<1x256xi32>
    %130 = arith.cmpi sge, %0, %129 : vector<1x256xi32>
    %c240_i32_39 = arith.constant 240 : i32
    %131 = vector.broadcast %c240_i32_39 : i32 to vector<1x256xi32>
    %132 = arith.cmpi slt, %0, %131 : vector<1x256xi32>
    %133 = arith.andi %130, %132 : vector<1x256xi1>
    %c0_i32_40 = arith.constant 0 : i32
    %134 = vector.broadcast %c0_i32_40 : i32 to vector<1x256xi32>
    %135 = arith.cmpi sge, %1, %134 : vector<1x256xi32>
    %136 = arith.andi %133, %135 : vector<1x256xi1>
    %c16_i32_41 = arith.constant 16 : i32
    %137 = vector.broadcast %c16_i32_41 : i32 to vector<1x256xi32>
    %138 = arith.cmpi slt, %1, %137 : vector<1x256xi32>
    %139 = arith.andi %136, %138 : vector<1x256xi1>
    %140 = arith.extui %139 : vector<1x256xi1> to vector<1x256xi32>
    %141 = arith.sitofp %140 : vector<1x256xi32> to vector<1x256xf32>
    %142 = vector.broadcast %141 : vector<1x256xf32> to vector<8x256xf32>
    %143 = arith.mulf %128, %142 : vector<8x256xf32>
    %c239_i32 = arith.constant 239 : i32
    %144 = tpu.dynamic_rotate %31 by %c239_i32 dim 1 : vector<8x256xf32>, i32 -> vector<8x256xf32>
    %c-16_i32_42 = arith.constant -16 : i32
    %145 = vector.broadcast %c-16_i32_42 : i32 to vector<1x256xi32>
    %146 = arith.cmpi sge, %0, %145 : vector<1x256xi32>
    %c240_i32_43 = arith.constant 240 : i32
    %147 = vector.broadcast %c240_i32_43 : i32 to vector<1x256xi32>
    %148 = arith.cmpi slt, %0, %147 : vector<1x256xi32>
    %149 = arith.andi %146, %148 : vector<1x256xi1>
    %c-1_i32_44 = arith.constant -1 : i32
    %150 = vector.broadcast %c-1_i32_44 : i32 to vector<1x256xi32>
    %151 = arith.cmpi sge, %1, %150 : vector<1x256xi32>
    %152 = arith.andi %149, %151 : vector<1x256xi1>
    %c15_i32_45 = arith.constant 15 : i32
    %153 = vector.broadcast %c15_i32_45 : i32 to vector<1x256xi32>
    %154 = arith.cmpi slt, %1, %153 : vector<1x256xi32>
    %155 = arith.andi %152, %154 : vector<1x256xi1>
    %156 = arith.extui %155 : vector<1x256xi1> to vector<1x256xi32>
    %157 = arith.sitofp %156 : vector<1x256xi32> to vector<1x256xf32>
    %158 = vector.broadcast %157 : vector<1x256xf32> to vector<8x256xf32>
    %159 = arith.mulf %144, %158 : vector<8x256xf32>
    %160 = tpu.concatenate %47, %63, %79, %95, %31, %111, %127, %143, %159 in 0 : vector<8x256xf32>, vector<8x256xf32>, vector<8x256xf32>, vector<8x256xf32>, vector<8x256xf32>, vector<8x256xf32>, vector<8x256xf32>, vector<8x256xf32>, vector<8x256xf32> -> vector<72x256xf32>
    %c51_i32 = arith.constant 51 : i32
    %161 = tpu.dynamic_rotate %31 by %c51_i32 dim 1 : vector<8x256xf32>, i32 -> vector<8x256xf32>
    %c48_i32 = arith.constant 48 : i32
    %162 = vector.broadcast %c48_i32 : i32 to vector<1x256xi32>
    %163 = arith.cmpi sge, %0, %162 : vector<1x256xi32>
    %c304_i32 = arith.constant 304 : i32
    %164 = vector.broadcast %c304_i32 : i32 to vector<1x256xi32>
    %165 = arith.cmpi slt, %0, %164 : vector<1x256xi32>
    %166 = arith.andi %163, %165 : vector<1x256xi1>
    %c3_i32 = arith.constant 3 : i32
    %167 = vector.broadcast %c3_i32 : i32 to vector<1x256xi32>
    %168 = arith.cmpi sge, %1, %167 : vector<1x256xi32>
    %169 = arith.andi %166, %168 : vector<1x256xi1>
    %c19_i32 = arith.constant 19 : i32
    %170 = vector.broadcast %c19_i32 : i32 to vector<1x256xi32>
    %171 = arith.cmpi slt, %1, %170 : vector<1x256xi32>
    %172 = arith.andi %169, %171 : vector<1x256xi1>
    %173 = arith.extui %172 : vector<1x256xi1> to vector<1x256xi32>
    %174 = arith.sitofp %173 : vector<1x256xi32> to vector<1x256xf32>
    %175 = vector.broadcast %174 : vector<1x256xf32> to vector<8x256xf32>
    %176 = arith.mulf %161, %175 : vector<8x256xf32>
    %c48_i32_46 = arith.constant 48 : i32
    %177 = tpu.dynamic_rotate %31 by %c48_i32_46 dim 1 : vector<8x256xf32>, i32 -> vector<8x256xf32>
    %c48_i32_47 = arith.constant 48 : i32
    %178 = vector.broadcast %c48_i32_47 : i32 to vector<1x256xi32>
    %179 = arith.cmpi sge, %0, %178 : vector<1x256xi32>
    %c304_i32_48 = arith.constant 304 : i32
    %180 = vector.broadcast %c304_i32_48 : i32 to vector<1x256xi32>
    %181 = arith.cmpi slt, %0, %180 : vector<1x256xi32>
    %182 = arith.andi %179, %181 : vector<1x256xi1>
    %c0_i32_49 = arith.constant 0 : i32
    %183 = vector.broadcast %c0_i32_49 : i32 to vector<1x256xi32>
    %184 = arith.cmpi sge, %1, %183 : vector<1x256xi32>
    %185 = arith.andi %182, %184 : vector<1x256xi1>
    %c16_i32_50 = arith.constant 16 : i32
    %186 = vector.broadcast %c16_i32_50 : i32 to vector<1x256xi32>
    %187 = arith.cmpi slt, %1, %186 : vector<1x256xi32>
    %188 = arith.andi %185, %187 : vector<1x256xi1>
    %189 = arith.extui %188 : vector<1x256xi1> to vector<1x256xi32>
    %190 = arith.sitofp %189 : vector<1x256xi32> to vector<1x256xf32>
    %191 = vector.broadcast %190 : vector<1x256xf32> to vector<8x256xf32>
    %192 = arith.mulf %177, %191 : vector<8x256xf32>
    %c45_i32 = arith.constant 45 : i32
    %193 = tpu.dynamic_rotate %31 by %c45_i32 dim 1 : vector<8x256xf32>, i32 -> vector<8x256xf32>
    %c48_i32_51 = arith.constant 48 : i32
    %194 = vector.broadcast %c48_i32_51 : i32 to vector<1x256xi32>
    %195 = arith.cmpi sge, %0, %194 : vector<1x256xi32>
    %c304_i32_52 = arith.constant 304 : i32
    %196 = vector.broadcast %c304_i32_52 : i32 to vector<1x256xi32>
    %197 = arith.cmpi slt, %0, %196 : vector<1x256xi32>
    %198 = arith.andi %195, %197 : vector<1x256xi1>
    %c-3_i32 = arith.constant -3 : i32
    %199 = vector.broadcast %c-3_i32 : i32 to vector<1x256xi32>
    %200 = arith.cmpi sge, %1, %199 : vector<1x256xi32>
    %201 = arith.andi %198, %200 : vector<1x256xi1>
    %c13_i32 = arith.constant 13 : i32
    %202 = vector.broadcast %c13_i32 : i32 to vector<1x256xi32>
    %203 = arith.cmpi slt, %1, %202 : vector<1x256xi32>
    %204 = arith.andi %201, %203 : vector<1x256xi1>
    %205 = arith.extui %204 : vector<1x256xi1> to vector<1x256xi32>
    %206 = arith.sitofp %205 : vector<1x256xi32> to vector<1x256xf32>
    %207 = vector.broadcast %206 : vector<1x256xf32> to vector<8x256xf32>
    %208 = arith.mulf %193, %207 : vector<8x256xf32>
    %c3_i32_53 = arith.constant 3 : i32
    %209 = tpu.dynamic_rotate %31 by %c3_i32_53 dim 1 : vector<8x256xf32>, i32 -> vector<8x256xf32>
    %c0_i32_54 = arith.constant 0 : i32
    %210 = vector.broadcast %c0_i32_54 : i32 to vector<1x256xi32>
    %211 = arith.cmpi sge, %0, %210 : vector<1x256xi32>
    %c256_i32_55 = arith.constant 256 : i32
    %212 = vector.broadcast %c256_i32_55 : i32 to vector<1x256xi32>
    %213 = arith.cmpi slt, %0, %212 : vector<1x256xi32>
    %214 = arith.andi %211, %213 : vector<1x256xi1>
    %c3_i32_56 = arith.constant 3 : i32
    %215 = vector.broadcast %c3_i32_56 : i32 to vector<1x256xi32>
    %216 = arith.cmpi sge, %1, %215 : vector<1x256xi32>
    %217 = arith.andi %214, %216 : vector<1x256xi1>
    %c19_i32_57 = arith.constant 19 : i32
    %218 = vector.broadcast %c19_i32_57 : i32 to vector<1x256xi32>
    %219 = arith.cmpi slt, %1, %218 : vector<1x256xi32>
    %220 = arith.andi %217, %219 : vector<1x256xi1>
    %221 = arith.extui %220 : vector<1x256xi1> to vector<1x256xi32>
    %222 = arith.sitofp %221 : vector<1x256xi32> to vector<1x256xf32>
    %223 = vector.broadcast %222 : vector<1x256xf32> to vector<8x256xf32>
    %224 = arith.mulf %209, %223 : vector<8x256xf32>
    %c253_i32 = arith.constant 253 : i32
    %225 = tpu.dynamic_rotate %31 by %c253_i32 dim 1 : vector<8x256xf32>, i32 -> vector<8x256xf32>
    %c0_i32_58 = arith.constant 0 : i32
    %226 = vector.broadcast %c0_i32_58 : i32 to vector<1x256xi32>
    %227 = arith.cmpi sge, %0, %226 : vector<1x256xi32>
    %c256_i32_59 = arith.constant 256 : i32
    %228 = vector.broadcast %c256_i32_59 : i32 to vector<1x256xi32>
    %229 = arith.cmpi slt, %0, %228 : vector<1x256xi32>
    %230 = arith.andi %227, %229 : vector<1x256xi1>
    %c-3_i32_60 = arith.constant -3 : i32
    %231 = vector.broadcast %c-3_i32_60 : i32 to vector<1x256xi32>
    %232 = arith.cmpi sge, %1, %231 : vector<1x256xi32>
    %233 = arith.andi %230, %232 : vector<1x256xi1>
    %c13_i32_61 = arith.constant 13 : i32
    %234 = vector.broadcast %c13_i32_61 : i32 to vector<1x256xi32>
    %235 = arith.cmpi slt, %1, %234 : vector<1x256xi32>
    %236 = arith.andi %233, %235 : vector<1x256xi1>
    %237 = arith.extui %236 : vector<1x256xi1> to vector<1x256xi32>
    %238 = arith.sitofp %237 : vector<1x256xi32> to vector<1x256xf32>
    %239 = vector.broadcast %238 : vector<1x256xf32> to vector<8x256xf32>
    %240 = arith.mulf %225, %239 : vector<8x256xf32>
    %c211_i32 = arith.constant 211 : i32
    %241 = tpu.dynamic_rotate %31 by %c211_i32 dim 1 : vector<8x256xf32>, i32 -> vector<8x256xf32>
    %c-48_i32 = arith.constant -48 : i32
    %242 = vector.broadcast %c-48_i32 : i32 to vector<1x256xi32>
    %243 = arith.cmpi sge, %0, %242 : vector<1x256xi32>
    %c208_i32 = arith.constant 208 : i32
    %244 = vector.broadcast %c208_i32 : i32 to vector<1x256xi32>
    %245 = arith.cmpi slt, %0, %244 : vector<1x256xi32>
    %246 = arith.andi %243, %245 : vector<1x256xi1>
    %c3_i32_62 = arith.constant 3 : i32
    %247 = vector.broadcast %c3_i32_62 : i32 to vector<1x256xi32>
    %248 = arith.cmpi sge, %1, %247 : vector<1x256xi32>
    %249 = arith.andi %246, %248 : vector<1x256xi1>
    %c19_i32_63 = arith.constant 19 : i32
    %250 = vector.broadcast %c19_i32_63 : i32 to vector<1x256xi32>
    %251 = arith.cmpi slt, %1, %250 : vector<1x256xi32>
    %252 = arith.andi %249, %251 : vector<1x256xi1>
    %253 = arith.extui %252 : vector<1x256xi1> to vector<1x256xi32>
    %254 = arith.sitofp %253 : vector<1x256xi32> to vector<1x256xf32>
    %255 = vector.broadcast %254 : vector<1x256xf32> to vector<8x256xf32>
    %256 = arith.mulf %241, %255 : vector<8x256xf32>
    %c208_i32_64 = arith.constant 208 : i32
    %257 = tpu.dynamic_rotate %31 by %c208_i32_64 dim 1 : vector<8x256xf32>, i32 -> vector<8x256xf32>
    %c-48_i32_65 = arith.constant -48 : i32
    %258 = vector.broadcast %c-48_i32_65 : i32 to vector<1x256xi32>
    %259 = arith.cmpi sge, %0, %258 : vector<1x256xi32>
    %c208_i32_66 = arith.constant 208 : i32
    %260 = vector.broadcast %c208_i32_66 : i32 to vector<1x256xi32>
    %261 = arith.cmpi slt, %0, %260 : vector<1x256xi32>
    %262 = arith.andi %259, %261 : vector<1x256xi1>
    %c0_i32_67 = arith.constant 0 : i32
    %263 = vector.broadcast %c0_i32_67 : i32 to vector<1x256xi32>
    %264 = arith.cmpi sge, %1, %263 : vector<1x256xi32>
    %265 = arith.andi %262, %264 : vector<1x256xi1>
    %c16_i32_68 = arith.constant 16 : i32
    %266 = vector.broadcast %c16_i32_68 : i32 to vector<1x256xi32>
    %267 = arith.cmpi slt, %1, %266 : vector<1x256xi32>
    %268 = arith.andi %265, %267 : vector<1x256xi1>
    %269 = arith.extui %268 : vector<1x256xi1> to vector<1x256xi32>
    %270 = arith.sitofp %269 : vector<1x256xi32> to vector<1x256xf32>
    %271 = vector.broadcast %270 : vector<1x256xf32> to vector<8x256xf32>
    %272 = arith.mulf %257, %271 : vector<8x256xf32>
    %c205_i32 = arith.constant 205 : i32
    %273 = tpu.dynamic_rotate %31 by %c205_i32 dim 1 : vector<8x256xf32>, i32 -> vector<8x256xf32>
    %c-48_i32_69 = arith.constant -48 : i32
    %274 = vector.broadcast %c-48_i32_69 : i32 to vector<1x256xi32>
    %275 = arith.cmpi sge, %0, %274 : vector<1x256xi32>
    %c208_i32_70 = arith.constant 208 : i32
    %276 = vector.broadcast %c208_i32_70 : i32 to vector<1x256xi32>
    %277 = arith.cmpi slt, %0, %276 : vector<1x256xi32>
    %278 = arith.andi %275, %277 : vector<1x256xi1>
    %c-3_i32_71 = arith.constant -3 : i32
    %279 = vector.broadcast %c-3_i32_71 : i32 to vector<1x256xi32>
    %280 = arith.cmpi sge, %1, %279 : vector<1x256xi32>
    %281 = arith.andi %278, %280 : vector<1x256xi1>
    %c13_i32_72 = arith.constant 13 : i32
    %282 = vector.broadcast %c13_i32_72 : i32 to vector<1x256xi32>
    %283 = arith.cmpi slt, %1, %282 : vector<1x256xi32>
    %284 = arith.andi %281, %283 : vector<1x256xi1>
    %285 = arith.extui %284 : vector<1x256xi1> to vector<1x256xi32>
    %286 = arith.sitofp %285 : vector<1x256xi32> to vector<1x256xf32>
    %287 = vector.broadcast %286 : vector<1x256xf32> to vector<8x256xf32>
    %288 = arith.mulf %273, %287 : vector<8x256xf32>
    %289 = tpu.concatenate %176, %192, %208, %224, %31, %240, %256, %272, %288 in 0 : vector<8x256xf32>, vector<8x256xf32>, vector<8x256xf32>, vector<8x256xf32>, vector<8x256xf32>, vector<8x256xf32>, vector<8x256xf32>, vector<8x256xf32>, vector<8x256xf32> -> vector<72x256xf32>
    %c0_73 = arith.constant 0 : index
    %c0_74 = arith.constant 0 : index
    %290 = vector.load %arg8[%c0_73, %c0_74] : memref<16x72xf32, #tpu.memory_space<vmem>>, vector<16x72xf32>
    %cst_75 = arith.constant dense<0.000000e+00> : vector<16x256xf32>
    %291 = tpu.matmul %290, %160, %cst_75 {dimension_numbers = #tpu.dot_dimension_numbers<[1], [0], [0], [1], [0, 0, 1, 1], [], []>} : vector<16x72xf32>, vector<72x256xf32>, vector<16x256xf32> -> vector<16x256xf32>
    %c0_76 = arith.constant 0 : index
    %c0_77 = arith.constant 0 : index
    %292 = vector.load %arg9[%c0_76, %c0_77] : memref<16x1xf32, #tpu.memory_space<vmem>>, vector<16x1xf32>
    %293 = vector.broadcast %292 : vector<16x1xf32> to vector<16x256xf32>
    %294 = arith.addf %291, %293 : vector<16x256xf32>
    %c0_78 = arith.constant 0 : index
    %c0_79 = arith.constant 0 : index
    %295 = vector.load %arg10[%c0_78, %c0_79] : memref<8x72xf32, #tpu.memory_space<vmem>>, vector<8x72xf32>
    %cst_80 = arith.constant dense<0.000000e+00> : vector<8x256xf32>
    %296 = tpu.matmul %295, %289, %cst_80 {dimension_numbers = #tpu.dot_dimension_numbers<[1], [0], [0], [1], [0, 0, 1, 1], [], []>} : vector<8x72xf32>, vector<72x256xf32>, vector<8x256xf32> -> vector<8x256xf32>
    %c0_81 = arith.constant 0 : index
    %c0_82 = arith.constant 0 : index
    %297 = vector.load %arg11[%c0_81, %c0_82] : memref<8x1xf32, #tpu.memory_space<vmem>>, vector<8x1xf32>
    %298 = vector.broadcast %297 : vector<8x1xf32> to vector<8x256xf32>
    %299 = arith.addf %296, %298 : vector<8x256xf32>
    %300 = tpu.concatenate %7, %294, %299 in 0 : vector<8x256xf32>, vector<16x256xf32>, vector<8x256xf32> -> vector<32x256xf32>
    %c0_83 = arith.constant 0 : index
    %c0_84 = arith.constant 0 : index
    %301 = vector.load %arg12[%c0_83, %c0_84] : memref<8x32xf32, #tpu.memory_space<vmem>>, vector<8x32xf32>
    %cst_85 = arith.constant dense<0.000000e+00> : vector<8x256xf32>
    %302 = tpu.matmul %301, %300, %cst_85 {dimension_numbers = #tpu.dot_dimension_numbers<[1], [0], [0], [1], [0, 0, 1, 1], [], []>} : vector<8x32xf32>, vector<32x256xf32>, vector<8x256xf32> -> vector<8x256xf32>
    %c0_86 = arith.constant 0 : index
    %c0_87 = arith.constant 0 : index
    %303 = vector.load %arg13[%c0_86, %c0_87] : memref<8x1xf32, #tpu.memory_space<vmem>>, vector<8x1xf32>
    %304 = vector.broadcast %303 : vector<8x1xf32> to vector<8x256xf32>
    %305 = arith.mulf %302, %304 : vector<8x256xf32>
    %c0_88 = arith.constant 0 : index
    %c0_89 = arith.constant 0 : index
    %306 = vector.load %arg14[%c0_88, %c0_89] : memref<8x1xf32, #tpu.memory_space<vmem>>, vector<8x1xf32>
    %307 = vector.broadcast %306 : vector<8x1xf32> to vector<8x256xf32>
    %308 = arith.addf %305, %307 : vector<8x256xf32>
    %cst_90 = arith.constant 2.000000e+01 : f32
    %309 = vector.broadcast %cst_90 : f32 to vector<8x256xf32>
    %310 = arith.minimumf %308, %309 : vector<8x256xf32>
    %311 = math.exp %310 : vector<8x256xf32>
    %cst_91 = arith.constant 1.000000e+00 : f32
    %312 = vector.broadcast %cst_91 : f32 to vector<8x256xf32>
    %313 = arith.addf %312, %311 : vector<8x256xf32>
    %cst_92 = arith.constant 1.000000e+00 : f32
    %314 = vector.broadcast %cst_92 : f32 to vector<8x256xf32>
    %315 = arith.addf %314, %311 : vector<8x256xf32>
    %316 = arith.mulf %313, %315 : vector<8x256xf32>
    %cst_93 = arith.constant 1.000000e+00 : f32
    %317 = vector.broadcast %cst_93 : f32 to vector<8x256xf32>
    %318 = arith.subf %316, %317 : vector<8x256xf32>
    %cst_94 = arith.constant 1.000000e+00 : f32
    %319 = vector.broadcast %cst_94 : f32 to vector<8x256xf32>
    %320 = arith.addf %316, %319 : vector<8x256xf32>
    %321 = tpu.reciprocal %320 {approx = true} : vector<8x256xf32> -> vector<8x256xf32>
    %322 = arith.mulf %318, %321 : vector<8x256xf32>
    %cst_95 = arith.constant 2.000000e+01 : f32
    %323 = vector.broadcast %cst_95 : f32 to vector<8x256xf32>
    %324 = arith.cmpf ogt, %308, %323 : vector<8x256xf32>
    %325 = arith.mulf %308, %322 : vector<8x256xf32>
    %326 = arith.select %324, %308, %325 : vector<8x256xi1>, vector<8x256xf32>
    %c0_96 = arith.constant 0 : index
    %c0_97 = arith.constant 0 : index
    %327 = vector.load %arg15[%c0_96, %c0_97] : memref<8x256xf32, #tpu.memory_space<vmem>>, vector<8x256xf32>
    tpu.vector_store %arg15[%c0_96, %c0_97], %326 {strides = array<i32>} : memref<8x256xf32, #tpu.memory_space<vmem>>, vector<8x256xf32>,
    return
  }
  func.func @transform_0(%arg0: i32) -> (i32, i32) {
    %c0_i32 = arith.constant 0 : i32
    %c0_i32_0 = arith.constant 0 : i32
    return %c0_i32, %arg0 : i32, i32
  }
  func.func @transform_1(%arg0: i32) -> (i32, i32) {
    %c0_i32 = arith.constant 0 : i32
    %c0_i32_0 = arith.constant 0 : i32
    return %c0_i32, %arg0 : i32, i32
  }
  func.func @transform_2(%arg0: i32) -> (i32, i32) {
    %c0_i32 = arith.constant 0 : i32
    %c0_i32_0 = arith.constant 0 : i32
    return %c0_i32, %arg0 : i32, i32
  }
  func.func @transform_3(%arg0: i32) -> (i32, i32) {
    %c0_i32 = arith.constant 0 : i32
    %c0_i32_0 = arith.constant 0 : i32
    %c0_i32_1 = arith.constant 0 : i32
    return %c0_i32, %c0_i32_0 : i32, i32
  }
  func.func @transform_4(%arg0: i32) -> (i32, i32) {
    %c0_i32 = arith.constant 0 : i32
    %c0_i32_0 = arith.constant 0 : i32
    %c0_i32_1 = arith.constant 0 : i32
    return %c0_i32, %c0_i32_0 : i32, i32
  }
  func.func @transform_5(%arg0: i32) -> (i32, i32) {
    %c0_i32 = arith.constant 0 : i32
    %c0_i32_0 = arith.constant 0 : i32
    %c0_i32_1 = arith.constant 0 : i32
    return %c0_i32, %c0_i32_0 : i32, i32
  }
  func.func @transform_6(%arg0: i32) -> (i32, i32) {
    %c0_i32 = arith.constant 0 : i32
    %c0_i32_0 = arith.constant 0 : i32
    %c0_i32_1 = arith.constant 0 : i32
    return %c0_i32, %c0_i32_0 : i32, i32
  }
  func.func @transform_7(%arg0: i32) -> (i32, i32) {
    %c0_i32 = arith.constant 0 : i32
    %c0_i32_0 = arith.constant 0 : i32
    %c0_i32_1 = arith.constant 0 : i32
    return %c0_i32, %c0_i32_0 : i32, i32
  }
  func.func @transform_8(%arg0: i32) -> (i32, i32) {
    %c0_i32 = arith.constant 0 : i32
    %c0_i32_0 = arith.constant 0 : i32
    %c0_i32_1 = arith.constant 0 : i32
    return %c0_i32, %c0_i32_0 : i32, i32
  }
  func.func @transform_9(%arg0: i32) -> (i32, i32) {
    %c0_i32 = arith.constant 0 : i32
    %c0_i32_0 = arith.constant 0 : i32
    %c0_i32_1 = arith.constant 0 : i32
    return %c0_i32, %c0_i32_0 : i32, i32
  }
  func.func @transform_10(%arg0: i32) -> (i32, i32) {
    %c0_i32 = arith.constant 0 : i32
    %c0_i32_0 = arith.constant 0 : i32
    %c0_i32_1 = arith.constant 0 : i32
    return %c0_i32, %c0_i32_0 : i32, i32
  }
  func.func @transform_11(%arg0: i32) -> (i32, i32) {
    %c0_i32 = arith.constant 0 : i32
    %c0_i32_0 = arith.constant 0 : i32
    %c0_i32_1 = arith.constant 0 : i32
    return %c0_i32, %c0_i32_0 : i32, i32
  }
  func.func @transform_12(%arg0: i32) -> (i32, i32) {
    %c0_i32 = arith.constant 0 : i32
    %c0_i32_0 = arith.constant 0 : i32
    %c0_i32_1 = arith.constant 0 : i32
    return %c0_i32, %c0_i32_0 : i32, i32
  }
  func.func @transform_13(%arg0: i32) -> (i32, i32) {
    %c0_i32 = arith.constant 0 : i32
    %c0_i32_0 = arith.constant 0 : i32
    %c0_i32_1 = arith.constant 0 : i32
    return %c0_i32, %c0_i32_0 : i32, i32
  }
  func.func @transform_14(%arg0: i32) -> (i32, i32) {
    %c0_i32 = arith.constant 0 : i32
    %c0_i32_0 = arith.constant 0 : i32
    return %c0_i32, %arg0 : i32, i32
  }
}

</mosaic_0001>

<llo_original>
// kernel: conv_block_forward.1
$region0: #{conv_block_forward.1}
  #allocation0 [shape = 'u32[]', space=smem, size = 0x4, offset = 0x4, fixed_abs, tag = 'smem constant byte address 0x4 - core index']
  #allocation1 [shape = 'u32[144,128]{1,0:T(1,128)}', space=vmem, size = 0x12000, scoped, tag = 'internal scratch']
  %s0 = inlined_call_operand.vmem [shape: s32[1,512], index: 0, kind: input, shape index: {}]
  %s1 = inlined_call_operand.vmem [shape: s32[1,512], index: 1, kind: input, shape index: {}]
  %s2 = inlined_call_operand.vmem [shape: f32[4,512], index: 2, kind: input, shape index: {}]
  %s3 = inlined_call_operand.vmem [shape: f32[8,4], index: 3, kind: input, shape index: {}]
  %s4 = inlined_call_operand.vmem [shape: f32[8,1], index: 4, kind: input, shape index: {}]
  %s5 = inlined_call_operand.vmem [shape: f32[8,1], index: 5, kind: input, shape index: {}]
  %s6 = inlined_call_operand.vmem [shape: f32[8,1], index: 6, kind: input, shape index: {}]
  %s7 = inlined_call_operand.vmem [shape: f32[16,72], index: 7, kind: input, shape index: {}]
  %s8 = inlined_call_operand.vmem [shape: f32[16,1], index: 8, kind: input, shape index: {}]
  %s9 = inlined_call_operand.vmem [shape: f32[8,72], index: 9, kind: input, shape index: {}]
  %s10 = inlined_call_operand.vmem [shape: f32[8,1], index: 10, kind: input, shape index: {}]
  %s11 = inlined_call_operand.vmem [shape: f32[8,32], index: 11, kind: input, shape index: {}]
  %s12 = inlined_call_operand.vmem [shape: f32[8,1], index: 12, kind: input, shape index: {}]
  %s13 = inlined_call_operand.vmem [shape: f32[8,1], index: 13, kind: input, shape index: {}]
  %s14 = inlined_call_operand.vmem [shape: f32[8,512], index: 14, kind: output, shape index: {}]
  %s15 = sld [smem:[#allocation0]]
  $region89: #{conv_block_forward.1} parent=0
    _
  %s17 = ssub.s32 1, %s15
  %s18 = scalar_select 0, %s17, %s15
  loop: start=0, step=1, limit=4
  $region2: #{conv_block_forward.1} parent=0 // loop_pre_header
    _
  $region3: #{conv_block_forward.1} parent=0 // loop_header
    %s20 = sphi 0, %s24
    %p21 = scmp.ge.s32.totalorder %s20, 4
    %s30 = sphi 0, %s32
    %s33 = sphi 0, %s30
    %s34 = sphi 0, %s33
    %s50 = sphi 0, %s34
    %s56 = sphi 0, %s58
    %s59 = sphi 0, %s56
    %s60 = sphi 0, %s59
    %s76 = sphi 0, %s60
    %s82 = sphi 0, %s84
    %s85 = sphi 0, %s82
    %s86 = sphi 0, %s85
    %s102 = sphi 0, %s86
    %s106 = sphi 0, %s106
    %s108 = sphi 0, %s106
    %s109 = sphi 0, %s108
    %s123 = sphi 0, %s109
    %s127 = sphi 0, %s127
    %s129 = sphi 0, %s127
    %s130 = sphi 0, %s129
    %s144 = sphi 0, %s130
    %s148 = sphi 0, %s148
    %s150 = sphi 0, %s148
    %s151 = sphi 0, %s150
    %s165 = sphi 0, %s151
    %s169 = sphi 0, %s169
    %s171 = sphi 0, %s169
    %s172 = sphi 0, %s171
    %s186 = sphi 0, %s172
    %s190 = sphi 0, %s190
    %s192 = sphi 0, %s190
    %s193 = sphi 0, %s192
    %s207 = sphi 0, %s193
    %s211 = sphi 0, %s211
    %s213 = sphi 0, %s211
    %s214 = sphi 0, %s213
    %s228 = sphi 0, %s214
    %s232 = sphi 0, %s232
    %s234 = sphi 0, %s232
    %s235 = sphi 0, %s234
    %s249 = sphi 0, %s235
    %s253 = sphi 0, %s253
    %s255 = sphi 0, %s253
    %s256 = sphi 0, %s255
    %s270 = sphi 0, %s256
    %s274 = sphi 0, %s274
    %s276 = sphi 0, %s274
    %s277 = sphi 0, %s276
    %s291 = sphi 0, %s277
    %s295 = sphi 0, %s295
    %s297 = sphi 0, %s295
    %s298 = sphi 0, %s297
    %s312 = sphi 0, %s298
    %s316 = sphi 0, %s316
    %s318 = sphi 0, %s316
    %s319 = sphi 0, %s318
    %s333 = sphi 0, %s319
    %s339 = sphi 0, %s341
    %s342 = sphi 0, %s339
    %s343 = sphi 0, %s342
    %s359 = sphi 0, %s343
  $region4: #{conv_block_forward.1} parent=0 // loop_header_branch
    %23 = sbr.rel (%p21) target = $region8
  $region5: #{conv_block_forward.1} parent=0 // loop_body
    %s25 = ssub.s32 %s20, 1
    %s26 = ssub.s32 %s20, 2
    %s27 = sadd.s32 %s20, 1
    %s28 = ssub.s32 %s20, %s27
    %p29 = scmp.eq.s32.totalorder %s28, 0
    %s31 = sadd.s32 %s30, 1
    %s32 = scalar_select %p29, %s30, %s31
    %p35 = pneg %p29
    %p36 = scmp.eq.s32.totalorder %s20, 1
    %p37 = por %p35, %p36
    %p38 = scmp.ne.s32.totalorder %s30, %s33
    %p39 = scmp.eq.s32.totalorder %s20, 0
    %p40 = por %p38, %p39
    %p41 = scmp.ne.s32.totalorder %s30, %s33
    %p42 = scmp.eq.s32.totalorder %s25, 1
    %p43 = por %p41, %p42
    %p44 = scmp.ne.s32.totalorder %s33, %s34
    %p45 = scmp.eq.s32.totalorder %s25, 0
    %p46 = por %p44, %p45
    %p47 = scmp.ne.s32.totalorder %s33, %s34
    %p48 = scmp.eq.s32.totalorder %s26, 1
    %p49 = por %p47, %p48
    %p51 = scmp.ne.s32.totalorder %s34, %s50
    %p52 = scmp.eq.s32.totalorder %s26, 0
    %p53 = por %p51, %p52
    %s54 = ssub.s32 %s20, %s27
    %p55 = scmp.eq.s32.totalorder %s54, 0
    %s57 = sadd.s32 %s56, 1
    %s58 = scalar_select %p55, %s56, %s57
    %p61 = pneg %p55
    %p62 = scmp.eq.s32.totalorder %s20, 1
    %p63 = por %p61, %p62
    %p64 = scmp.ne.s32.totalorder %s56, %s59
    %p65 = scmp.eq.s32.totalorder %s20, 0
    %p66 = por %p64, %p65
    %p67 = scmp.ne.s32.totalorder %s56, %s59
    %p68 = scmp.eq.s32.totalorder %s25, 1
    %p69 = por %p67, %p68
    %p70 = scmp.ne.s32.totalorder %s59, %s60
    %p71 = scmp.eq.s32.totalorder %s25, 0
    %p72 = por %p70, %p71
    %p73 = scmp.ne.s32.totalorder %s59, %s60
    %p74 = scmp.eq.s32.totalorder %s26, 1
    %p75 = por %p73, %p74
    %p77 = scmp.ne.s32.totalorder %s60, %s76
    %p78 = scmp.eq.s32.totalorder %s26, 0
    %p79 = por %p77, %p78
    %s80 = ssub.s32 %s20, %s27
    %p81 = scmp.eq.s32.totalorder %s80, 0
    %s83 = sadd.s32 %s82, 1
    %s84 = scalar_select %p81, %s82, %s83
    %p87 = pneg %p81
    %p88 = scmp.eq.s32.totalorder %s20, 1
    %p89 = por %p87, %p88
    %p90 = scmp.ne.s32.totalorder %s82, %s85
    %p91 = scmp.eq.s32.totalorder %s20, 0
    %p92 = por %p90, %p91
    %p93 = scmp.ne.s32.totalorder %s82, %s85
    %p94 = scmp.eq.s32.totalorder %s25, 1
    %p95 = por %p93, %p94
    %p96 = scmp.ne.s32.totalorder %s85, %s86
    %p97 = scmp.eq.s32.totalorder %s25, 0
    %p98 = por %p96, %p97
    %p99 = scmp.ne.s32.totalorder %s85, %s86
    %p100 = scmp.eq.s32.totalorder %s26, 1
    %p101 = por %p99, %p100
    %p103 = scmp.ne.s32.totalorder %s86, %s102
    %p104 = scmp.eq.s32.totalorder %s26, 0
    %p105 = por %p103, %p104
    %s107 = sadd.s32 %s106, 1
    %p110 = scmp.eq.s32.totalorder %s20, 1
    %p111 = scmp.ne.s32.totalorder %s106, %s108
    %p112 = scmp.eq.s32.totalorder %s20, 0
    %p113 = por %p111, %p112
    %p114 = scmp.ne.s32.totalorder %s106, %s108
    %p115 = scmp.eq.s32.totalorder %s25, 1
    %p116 = por %p114, %p115
    %p117 = scmp.ne.s32.totalorder %s108, %s109
    %p118 = scmp.eq.s32.totalorder %s25, 0
    %p119 = por %p117, %p118
    %p120 = scmp.ne.s32.totalorder %s108, %s109
    %p121 = scmp.eq.s32.totalorder %s26, 1
    %p122 = por %p120, %p121
    %p124 = scmp.ne.s32.totalorder %s109, %s123
    %p125 = scmp.eq.s32.totalorder %s26, 0
    %p126 = por %p124, %p125
    %s128 = sadd.s32 %s127, 1
    %p131 = scmp.eq.s32.totalorder %s20, 1
    %p132 = scmp.ne.s32.totalorder %s127, %s129
    %p133 = scmp.eq.s32.totalorder %s20, 0
    %p134 = por %p132, %p133
    %p135 = scmp.ne.s32.totalorder %s127, %s129
    %p136 = scmp.eq.s32.totalorder %s25, 1
    %p137 = por %p135, %p136
    %p138 = scmp.ne.s32.totalorder %s129, %s130
    %p139 = scmp.eq.s32.totalorder %s25, 0
    %p140 = por %p138, %p139
    %p141 = scmp.ne.s32.totalorder %s129, %s130
    %p142 = scmp.eq.s32.totalorder %s26, 1
    %p143 = por %p141, %p142
    %p145 = scmp.ne.s32.totalorder %s130, %s144
    %p146 = scmp.eq.s32.totalorder %s26, 0
    %p147 = por %p145, %p146
    %s149 = sadd.s32 %s148, 1
    %p152 = scmp.eq.s32.totalorder %s20, 1
    %p153 = scmp.ne.s32.totalorder %s148, %s150
    %p154 = scmp.eq.s32.totalorder %s20, 0
    %p155 = por %p153, %p154
    %p156 = scmp.ne.s32.totalorder %s148, %s150
    %p157 = scmp.eq.s32.totalorder %s25, 1
    %p158 = por %p156, %p157
    %p159 = scmp.ne.s32.totalorder %s150, %s151
    %p160 = scmp.eq.s32.totalorder %s25, 0
    %p161 = por %p159, %p160
    %p162 = scmp.ne.s32.totalorder %s150, %s151
    %p163 = scmp.eq.s32.totalorder %s26, 1
    %p164 = por %p162, %p163
    %p166 = scmp.ne.s32.totalorder %s151, %s165
    %p167 = scmp.eq.s32.totalorder %s26, 0
    %p168 = por %p166, %p167
    %s170 = sadd.s32 %s169, 1
    %p173 = scmp.eq.s32.totalorder %s20, 1
    %p174 = scmp.ne.s32.totalorder %s169, %s171
    %p175 = scmp.eq.s32.totalorder %s20, 0
    %p176 = por %p174, %p175
    %p177 = scmp.ne.s32.totalorder %s169, %s171
    %p178 = scmp.eq.s32.totalorder %s25, 1
    %p179 = por %p177, %p178
    %p180 = scmp.ne.s32.totalorder %s171, %s172
    %p181 = scmp.eq.s32.totalorder %s25, 0
    %p182 = por %p180, %p181
    %p183 = scmp.ne.s32.totalorder %s171, %s172
    %p184 = scmp.eq.s32.totalorder %s26, 1
    %p185 = por %p183, %p184
    %p187 = scmp.ne.s32.totalorder %s172, %s186
    %p188 = scmp.eq.s32.totalorder %s26, 0
    %p189 = por %p187, %p188
    %s191 = sadd.s32 %s190, 1
    %p194 = scmp.eq.s32.totalorder %s20, 1
    %p195 = scmp.ne.s32.totalorder %s190, %s192
    %p196 = scmp.eq.s32.totalorder %s20, 0
    %p197 = por %p195, %p196
    %p198 = scmp.ne.s32.totalorder %s190, %s192
    %p199 = scmp.eq.s32.totalorder %s25, 1
    %p200 = por %p198, %p199
    %p201 = scmp.ne.s32.totalorder %s192, %s193
    %p202 = scmp.eq.s32.totalorder %s25, 0
    %p203 = por %p201, %p202
    %p204 = scmp.ne.s32.totalorder %s192, %s193
    %p205 = scmp.eq.s32.totalorder %s26, 1
    %p206 = por %p204, %p205
    %p208 = scmp.ne.s32.totalorder %s193, %s207
    %p209 = scmp.eq.s32.totalorder %s26, 0
    %p210 = por %p208, %p209
    %s212 = sadd.s32 %s211, 1
    %p215 = scmp.eq.s32.totalorder %s20, 1
    %p216 = scmp.ne.s32.totalorder %s211, %s213
    %p217 = scmp.eq.s32.totalorder %s20, 0
    %p218 = por %p216, %p217
    %p219 = scmp.ne.s32.totalorder %s211, %s213
    %p220 = scmp.eq.s32.totalorder %s25, 1
    %p221 = por %p219, %p220
    %p222 = scmp.ne.s32.totalorder %s213, %s214
    %p223 = scmp.eq.s32.totalorder %s25, 0
    %p224 = por %p222, %p223
    %p225 = scmp.ne.s32.totalorder %s213, %s214
    %p226 = scmp.eq.s32.totalorder %s26, 1
    %p227 = por %p225, %p226
    %p229 = scmp.ne.s32.totalorder %s214, %s228
    %p230 = scmp.eq.s32.totalorder %s26, 0
    %p231 = por %p229, %p230
    %s233 = sadd.s32 %s232, 1
    %p236 = scmp.eq.s32.totalorder %s20, 1
    %p237 = scmp.ne.s32.totalorder %s232, %s234
    %p238 = scmp.eq.s32.totalorder %s20, 0
    %p239 = por %p237, %p238
    %p240 = scmp.ne.s32.totalorder %s232, %s234
    %p241 = scmp.eq.s32.totalorder %s25, 1
    %p242 = por %p240, %p241
    %p243 = scmp.ne.s32.totalorder %s234, %s235
    %p244 = scmp.eq.s32.totalorder %s25, 0
    %p245 = por %p243, %p244
    %p246 = scmp.ne.s32.totalorder %s234, %s235
    %p247 = scmp.eq.s32.totalorder %s26, 1
    %p248 = por %p246, %p247
    %p250 = scmp.ne.s32.totalorder %s235, %s249
    %p251 = scmp.eq.s32.totalorder %s26, 0
    %p252 = por %p250, %p251
    %s254 = sadd.s32 %s253, 1
    %p257 = scmp.eq.s32.totalorder %s20, 1
    %p258 = scmp.ne.s32.totalorder %s253, %s255
    %p259 = scmp.eq.s32.totalorder %s20, 0
    %p260 = por %p258, %p259
    %p261 = scmp.ne.s32.totalorder %s253, %s255
    %p262 = scmp.eq.s32.totalorder %s25, 1
    %p263 = por %p261, %p262
    %p264 = scmp.ne.s32.totalorder %s255, %s256
    %p265 = scmp.eq.s32.totalorder %s25, 0
    %p266 = por %p264, %p265
    %p267 = scmp.ne.s32.totalorder %s255, %s256
    %p268 = scmp.eq.s32.totalorder %s26, 1
    %p269 = por %p267, %p268
    %p271 = scmp.ne.s32.totalorder %s256, %s270
    %p272 = scmp.eq.s32.totalorder %s26, 0
    %p273 = por %p271, %p272
    %s275 = sadd.s32 %s274, 1
    %p278 = scmp.eq.s32.totalorder %s20, 1
    %p279 = scmp.ne.s32.totalorder %s274, %s276
    %p280 = scmp.eq.s32.totalorder %s20, 0
    %p281 = por %p279, %p280
    %p282 = scmp.ne.s32.totalorder %s274, %s276
    %p283 = scmp.eq.s32.totalorder %s25, 1
    %p284 = por %p282, %p283
    %p285 = scmp.ne.s32.totalorder %s276, %s277
    %p286 = scmp.eq.s32.totalorder %s25, 0
    %p287 = por %p285, %p286
    %p288 = scmp.ne.s32.totalorder %s276, %s277
    %p289 = scmp.eq.s32.totalorder %s26, 1
    %p290 = por %p288, %p289
    %p292 = scmp.ne.s32.totalorder %s277, %s291
    %p293 = scmp.eq.s32.totalorder %s26, 0
    %p294 = por %p292, %p293
    %s296 = sadd.s32 %s295, 1
    %p299 = scmp.eq.s32.totalorder %s20, 1
    %p300 = scmp.ne.s32.totalorder %s295, %s297
    %p301 = scmp.eq.s32.totalorder %s20, 0
    %p302 = por %p300, %p301
    %p303 = scmp.ne.s32.totalorder %s295, %s297
    %p304 = scmp.eq.s32.totalorder %s25, 1
    %p305 = por %p303, %p304
    %p306 = scmp.ne.s32.totalorder %s297, %s298
    %p307 = scmp.eq.s32.totalorder %s25, 0
    %p308 = por %p306, %p307
    %p309 = scmp.ne.s32.totalorder %s297, %s298
    %p310 = scmp.eq.s32.totalorder %s26, 1
    %p311 = por %p309, %p310
    %p313 = scmp.ne.s32.totalorder %s298, %s312
    %p314 = scmp.eq.s32.totalorder %s26, 0
    %p315 = por %p313, %p314
    %s317 = sadd.s32 %s316, 1
    %p320 = scmp.eq.s32.totalorder %s20, 1
    %p321 = scmp.ne.s32.totalorder %s316, %s318
    %p322 = scmp.eq.s32.totalorder %s20, 0
    %p323 = por %p321, %p322
    %p324 = scmp.ne.s32.totalorder %s316, %s318
    %p325 = scmp.eq.s32.totalorder %s25, 1
    %p326 = por %p324, %p325
    %p327 = scmp.ne.s32.totalorder %s318, %s319
    %p328 = scmp.eq.s32.totalorder %s25, 0
    %p329 = por %p327, %p328
    %p330 = scmp.ne.s32.totalorder %s318, %s319
    %p331 = scmp.eq.s32.totalorder %s26, 1
    %p332 = por %p330, %p331
    %p334 = scmp.ne.s32.totalorder %s319, %s333
    %p335 = scmp.eq.s32.totalorder %s26, 0
    %p336 = por %p334, %p335
    %s337 = ssub.s32 %s20, %s27
    %p338 = scmp.eq.s32.totalorder %s337, 0
    %s340 = sadd.s32 %s339, 1
    %s341 = scalar_select %p338, %s339, %s340
    %p344 = pneg %p338
    %p345 = scmp.eq.s32.totalorder %s20, 1
    %p346 = por %p344, %p345
    %p347 = scmp.ne.s32.totalorder %s339, %s342
    %p348 = scmp.eq.s32.totalorder %s20, 0
    %p349 = por %p347, %p348
    %p350 = scmp.ne.s32.totalorder %s339, %s342
    %p351 = scmp.eq.s32.totalorder %s25, 1
    %p352 = por %p350, %p351
    %p353 = scmp.ne.s32.totalorder %s342, %s343
    %p354 = scmp.eq.s32.totalorder %s25, 0
    %p355 = por %p353, %p354
    %p356 = scmp.ne.s32.totalorder %s342, %s343
    %p357 = scmp.eq.s32.totalorder %s26, 1
    %p358 = por %p356, %p357
    %p360 = scmp.ne.s32.totalorder %s343, %s359
    %p361 = scmp.eq.s32.totalorder %s26, 0
    %p362 = por %p360, %p361
    %p363 = scmp.le.s32.totalorder 1, %s20
    %p364 = scmp.lt.s32.totalorder %s20, 3
    %p365 = pnand %p363, %p364
    %p366 = pneg %p365
    // Predicated region
    $region9: #{conv_block_forward.1} parent=5 // pred_check
      _
    $region10: #{conv_block_forward.1} parent=5 // pred_check_branch
      %368 = sbr.rel (%p365) target = $region12
    $region11: #{conv_block_forward.1} parent=5 // pred_region
      %s369 = ssub.s32 %s20, 1
      // Predicated region
      $region13: #{conv_block_forward.1} parent=11 // pred_check
        %p370 = pneg %p119
      $region14: #{conv_block_forward.1} parent=11 // pred_check_branch
        %372 = sbr.rel (%p370) target = $region16
      $region15: #{conv_block_forward.1} parent=11 // pred_region
        _
      $region16: #{conv_block_forward.1} parent=11 // pred_fallthru
        _
      // Predicated region
      $region17: #{conv_block_forward.1} parent=11 // pred_check
        %p373 = pneg %p140
      $region18: #{conv_block_forward.1} parent=11 // pred_check_branch
        %375 = sbr.rel (%p373) target = $region20
      $region19: #{conv_block_forward.1} parent=11 // pred_region
        _
      $region20: #{conv_block_forward.1} parent=11 // pred_fallthru
        _
      // Predicated region
      $region21: #{conv_block_forward.1} parent=11 // pred_check
        %p376 = pneg %p161
      $region22: #{conv_block_forward.1} parent=11 // pred_check_branch
        %378 = sbr.rel (%p376) target = $region24
      $region23: #{conv_block_forward.1} parent=11 // pred_region
        _
      $region24: #{conv_block_forward.1} parent=11 // pred_fallthru
        _
      // Predicated region
      $region25: #{conv_block_forward.1} parent=11 // pred_check
        %p379 = pneg %p182
      $region26: #{conv_block_forward.1} parent=11 // pred_check_branch
        %381 = sbr.rel (%p379) target = $region28
      $region27: #{conv_block_forward.1} parent=11 // pred_region
        _
      $region28: #{conv_block_forward.1} parent=11 // pred_fallthru
        _
      // Predicated region
      $region29: #{conv_block_forward.1} parent=11 // pred_check
        %p382 = pneg %p203
      $region30: #{conv_block_forward.1} parent=11 // pred_check_branch
        %384 = sbr.rel (%p382) target = $region32
      $region31: #{conv_block_forward.1} parent=11 // pred_region
        _
      $region32: #{conv_block_forward.1} parent=11 // pred_fallthru
        _
      // Predicated region
      $region33: #{conv_block_forward.1} parent=11 // pred_check
        %p385 = pneg %p224
      $region34: #{conv_block_forward.1} parent=11 // pred_check_branch
        %387 = sbr.rel (%p385) target = $region36
      $region35: #{conv_block_forward.1} parent=11 // pred_region
        _
      $region36: #{conv_block_forward.1} parent=11 // pred_fallthru
        _
      // Predicated region
      $region37: #{conv_block_forward.1} parent=11 // pred_check
        %p388 = pneg %p245
      $region38: #{conv_block_forward.1} parent=11 // pred_check_branch
        %390 = sbr.rel (%p388) target = $region40
      $region39: #{conv_block_forward.1} parent=11 // pred_region
        _
      $region40: #{conv_block_forward.1} parent=11 // pred_fallthru
        _
      // Predicated region
      $region41: #{conv_block_forward.1} parent=11 // pred_check
        %p391 = pneg %p266
      $region42: #{conv_block_forward.1} parent=11 // pred_check_branch
        %393 = sbr.rel (%p391) target = $region44
      $region43: #{conv_block_forward.1} parent=11 // pred_region
        _
      $region44: #{conv_block_forward.1} parent=11 // pred_fallthru
        _
      // Predicated region
      $region45: #{conv_block_forward.1} parent=11 // pred_check
        %p394 = pneg %p287
      $region46: #{conv_block_forward.1} parent=11 // pred_check_branch
        %396 = sbr.rel (%p394) target = $region48
      $region47: #{conv_block_forward.1} parent=11 // pred_region
        _
      $region48: #{conv_block_forward.1} parent=11 // pred_fallthru
        _
      // Predicated region
      $region49: #{conv_block_forward.1} parent=11 // pred_check
        %p397 = pneg %p308
      $region50: #{conv_block_forward.1} parent=11 // pred_check_branch
        %399 = sbr.rel (%p397) target = $region52
      $region51: #{conv_block_forward.1} parent=11 // pred_region
        _
      $region52: #{conv_block_forward.1} parent=11 // pred_fallthru
        _
      // Predicated region
      $region53: #{conv_block_forward.1} parent=11 // pred_check
        %p400 = pneg %p329
      $region54: #{conv_block_forward.1} parent=11 // pred_check_branch
        %402 = sbr.rel (%p400) target = $region56
      $region55: #{conv_block_forward.1} parent=11 // pred_region
        _
      $region56: #{conv_block_forward.1} parent=11 // pred_fallthru
        _
    $region12: #{conv_block_forward.1} parent=5 // pred_fallthru
      _
    %p403 = scmp.lt.s32.totalorder %s20, 2
    // Predicated region
    $region57: #{conv_block_forward.1} parent=5 // pred_check
      %p404 = pneg %p403
    $region58: #{conv_block_forward.1} parent=5 // pred_check_branch
      %406 = sbr.rel (%p404) target = $region60
    $region59: #{conv_block_forward.1} parent=5 // pred_region
      // Predicated region
      $region61: #{conv_block_forward.1} parent=59 // pred_check
        %p407 = pneg %p40
      $region62: #{conv_block_forward.1} parent=59 // pred_check_branch
        %409 = sbr.rel (%p407) target = $region64
      $region63: #{conv_block_forward.1} parent=59 // pred_region
        %s410 = smul.u32 2, %s20
        %p411 = scmp.lt.s32.totalorder %s410, 3
        %s412 = scalar_select %p411, %s410, 3
        %s413 = scalar_lea.vmem %s0, %s412
        %s414 = smul.u32 2, %s20
      $region64: #{conv_block_forward.1} parent=59 // pred_fallthru
        _
      // Predicated region
      $region65: #{conv_block_forward.1} parent=59 // pred_check
        %p415 = pneg %p66
      $region66: #{conv_block_forward.1} parent=59 // pred_check_branch
        %417 = sbr.rel (%p415) target = $region68
      $region67: #{conv_block_forward.1} parent=59 // pred_region
        %s418 = smul.u32 2, %s20
        %p419 = scmp.lt.s32.totalorder %s418, 3
        %s420 = scalar_select %p419, %s418, 3
        %s421 = scalar_lea.vmem %s1, %s420
        %s422 = smul.u32 2, %s20
      $region68: #{conv_block_forward.1} parent=59 // pred_fallthru
        _
      // Predicated region
      $region69: #{conv_block_forward.1} parent=59 // pred_check
        %p423 = pneg %p92
      $region70: #{conv_block_forward.1} parent=59 // pred_check_branch
        %425 = sbr.rel (%p423) target = $region72
      $region71: #{conv_block_forward.1} parent=59 // pred_region
        %s426 = smul.u32 2, %s20
        %p427 = scmp.lt.s32.totalorder %s426, 3
        %s428 = scalar_select %p427, %s426, 3
        %s429 = smul.addr %s428, 4
        %s430 = scalar_lea.vmem %s2, %s429
        %s431 = smul.u32 2, %s20
      $region72: #{conv_block_forward.1} parent=59 // pred_fallthru
        _
    $region60: #{conv_block_forward.1} parent=5 // pred_fallthru
      _
    %p432 = scmp.le.s32.totalorder 1, %s20
    %p433 = scmp.lt.s32.totalorder %s20, 3
    %p434 = pnand %p432, %p433
    %p435 = pneg %p434
    // Predicated region
    $region73: #{conv_block_forward.1} parent=5 // pred_check
      _
    $region74: #{conv_block_forward.1} parent=5 // pred_check_branch
      %437 = sbr.rel (%p434) target = $region76
    $region75: #{conv_block_forward.1} parent=5 // pred_region
      %s438 = ssub.s32 %s20, 1
      %s439 = smul.u32 2, %s25
      %p440 = scmp.lt.s32.totalorder %s439, 3
      %s441 = scalar_select %p440, %s439, 3
      %s442 = scalar_lea.vmem %s0, %s441
      %p443 = pneg %p46
      %p444 = pneg %p43
      %s445 = smul.u32 2, %s25
      %p446 = scmp.lt.s32.totalorder %s445, 3
      %s447 = scalar_select %p446, %s445, 3
      %s448 = scalar_lea.vmem %s1, %s447
      %p449 = pneg %p72
      %p450 = pneg %p69
      %s451 = smul.u32 2, %s25
      %p452 = scmp.lt.s32.totalorder %s451, 3
      %s453 = scalar_select %p452, %s451, 3
      %s454 = smul.addr %s453, 4
      %s455 = scalar_lea.vmem %s2, %s454
      %p456 = pneg %p98
      %p457 = pneg %p95
      %p458 = pneg %p119
      %p459 = pneg %p116
      %p460 = pneg %p140
      %p461 = pneg %p137
      %p462 = pneg %p161
      %p463 = pneg %p158
      %p464 = pneg %p182
      %p465 = pneg %p179
      %p466 = pneg %p203
      %p467 = pneg %p200
      %p468 = pneg %p224
      %p469 = pneg %p221
      %p470 = pneg %p245
      %p471 = pneg %p242
      %p472 = pneg %p266
      %p473 = pneg %p263
      %p474 = pneg %p287
      %p475 = pneg %p284
      %p476 = pneg %p308
      %p477 = pneg %p305
      %p478 = pneg %p329
      %p479 = pneg %p326
      %p480 = pneg %p355
      %p481 = pneg %p352
      %s482 = smul.u32 2, %s25
      %p483 = scmp.lt.s32.totalorder %s482, 3
      %s484 = scalar_select %p483, %s482, 3
      %s485 = smul.addr %s484, 8
      %s486 = scalar_lea.vmem %s14, %s485
      %s487 = smul.u32 2, %s25
      %p488 = scmp.lt.s32.totalorder %s487, 3
      %s489 = scalar_select %p488, %s487, 3
      %s490 = scalar_lea.vmem %s0, %s489
      %s491 = smul.u32 2, %s25
      %s492 = smul.u32 2, %s25
      %p493 = scmp.lt.s32.totalorder %s492, 3
      %s494 = scalar_select %p493, %s492, 3
      %s495 = scalar_lea.vmem %s1, %s494
      %s496 = smul.u32 2, %s25
      %s497 = smul.u32 2, %s25
      %p498 = scmp.lt.s32.totalorder %s497, 3
      %s499 = scalar_select %p498, %s497, 3
      %s500 = smul.addr %s499, 4
      %s501 = scalar_lea.vmem %s2, %s500
      %s502 = smul.u32 2, %s25
      %s503 = smul.u32 2, %s25
      %p504 = scmp.lt.s32.totalorder %s503, 3
      %s505 = scalar_select %p504, %s503, 3
      %s506 = smul.addr %s505, 8
      %s507 = scalar_lea.vmem %s14, %s506
      %s508 = smul.u32 2, %s25
      %v509 = vld [vmem:[%s490] sm:$0x3]
      %v510 = vld [vmem:[%s495] sm:$0x3]
      %v511 = vld [vmem:[%s3] sm:$0xff]
      %v512 = vld [vmem:[%s501] sm:$0xff]
      %v513 = vld [vmem:[%s4] sm:$0xff]
      %515 = vset.pattern.permute.xlu0 0
      %516 = vperm.xlu0 %515, %v513
      %v517 = vpop.permute.xlu0 %516
      %v520 = vcombine.high %v512, %v512
      %vm521 = vcmask 31744
      %v523 = vsel %vm521, %v511, 0
      %vm525 = vcmask 1043456
      %v526 = vsel %vm525, %v512, 0
      %v528 = vsel %vm525, %v520, 0
      %530 = vmatprep.subr.mxu0 %v528
      %531 = vmatpush1.msra.mxu0 %v526
      %532 = vmatprep.subr.mxu0 0.0
      %533 = vmatpush1.msra.mxu0 0.0
      %534 = vmatprep.subr.mxu0 0.0
      %535 = vmatpush1.msra.mxu0 0.0
      %536 = vmatprep.subr.mxu0 0.0
      %537 = vmatpush1.msra.mxu0 0.0
      %538 = vmatprep.subr.mxu0 0.0
      %539 = vmatpush1.msra.mxu0 0.0
      %540 = vmatprep.subr.mxu0 0.0
      %541 = vmatpush1.msra.mxu0 0.0
      %542 = vmatprep.subr.mxu0 0.0
      %543 = vmatpush1.msra.mxu0 0.0
      %544 = vmatprep.subr.mxu0 0.0
      %545 = vmatpush1.msra.mxu0 0.0
      %546 = vmatprep.subr.mxu0 0.0
      %547 = vmatpush1.msra.mxu0 0.0
      %548 = vmatprep.subr.mxu0 0.0
      %549 = vmatpush1.msra.mxu0 0.0
      %550 = vmatprep.subr.mxu0 0.0
      %551 = vmatpush1.msra.mxu0 0.0
      %552 = vmatprep.subr.mxu0 0.0
      %553 = vmatpush1.msra.mxu0 0.0
      %554 = vmatprep.subr.mxu0 0.0
      %555 = vmatpush1.msra.mxu0 0.0
      %556 = vmatprep.subr.mxu0 0.0
      %557 = vmatpush1.msra.mxu0 0.0
      %558 = vmatprep.subr.mxu0 0.0
      %559 = vmatpush1.msra.mxu0 0.0
      %560 = vmatprep.subr.mxu0 0.0
      %561 = vmatpush1.msra.mxu0 0.0
      %562 = vmatprep.subr.mxu0 0.0
      %563 = vmatpush1.msra.mxu0 0.0
      %564 = vmatprep.subr.mxu0 0.0
      %565 = vmatpush1.msra.mxu0 0.0
      %566 = vmatprep.subr.mxu0 0.0
      %567 = vmatpush1.msra.mxu0 0.0
      %568 = vmatprep.subr.mxu0 0.0
      %569 = vmatpush1.msra.mxu0 0.0
      %570 = vmatprep.subr.mxu0 0.0
      %571 = vmatpush1.msra.mxu0 0.0
      %572 = vmatprep.subr.mxu0 0.0
      %573 = vmatpush1.msra.mxu0 0.0
      %574 = vmatprep.subr.mxu0 0.0
      %575 = vmatpush1.msra.mxu0 0.0
      %576 = vmatprep.subr.mxu0 0.0
      %577 = vmatpush1.msra.mxu0 0.0
      %578 = vmatprep.subr.mxu0 0.0
      %579 = vmatpush1.msra.mxu0 0.0
      %580 = vmatprep.subr.mxu0 0.0
      %581 = vmatpush1.msra.mxu0 0.0
      %582 = vmatprep.subr.mxu0 0.0
      %583 = vmatpush1.msra.mxu0 0.0
      %584 = vmatprep.subr.mxu0 0.0
      %585 = vmatpush1.msra.mxu0 0.0
      %586 = vmatprep.subr.mxu0 0.0
      %587 = vmatpush1.msra.mxu0 0.0
      %588 = vmatprep.subr.mxu0 0.0
      %589 = vmatpush1.msra.mxu0 0.0
      %590 = vmatprep.subr.mxu0 0.0
      %591 = vmatpush1.msra.mxu0 0.0
      %592 = vmatprep.subr.mxu0 0.0
      %593 = vmatpush1.msra.mxu0 0.0
      %594 = vmatprep.mubr.f32.mxu0 0.0
      %595 = vmatmul.mubr.f32.gmra.mrb[0].mxu0 %v523
      %v596 = vpop.f32.mrb[0].mxu0
      %v597 = vadd.f32 %v517, %v596
      %v598 = vpop.f32.mrb[0].mxu0
      %v599 = vadd.f32 %v517, %v598
      %600 = vdwg.mxu0
      %v601 = vld [vmem:[%s5] sm:$0xff]
      %603 = vset.pattern.permute.xlu0 0
      %604 = vperm.xlu0 %603, %v601
      %v605 = vpop.permute.xlu0 %604
      %v607 = vmul.f32 %v597, %v605
      %v608 = vmul.f32 %v599, %v605
      %v609 = vld [vmem:[%s6] sm:$0xff]
      %611 = vset.pattern.permute.xlu0 0
      %612 = vperm.xlu0 %611, %v609
      %v613 = vpop.permute.xlu0 %612
      %v615 = vadd.f32 %v607, %v613
      %v616 = vadd.f32 %v608, %v613
      %v617 = vmin.f32 %v615, 20.0
      %v618 = vmin.f32 %v616, 20.0
      %v619 = vmul.f32 %v617, 1.442695
      %v620 = vpow.pop %v619
      %v621 = vmul.f32 %v618, 1.442695
      %v622 = vpow.pop %v621
      %v623 = vadd.f32 %v620, 1.0
      %v624 = vadd.f32 %v622, 1.0
      %v625 = vmul.f32 %v623, %v623
      %v626 = vmul.f32 %v624, %v624
      %v627 = vsub.f32 %v625, 1.0
      %v628 = vsub.f32 %v626, 1.0
      %v629 = vadd.f32 %v625, 1.0
      %v630 = vadd.f32 %v626, 1.0
      %v631 = vrcp.pop %v629
      %v632 = vrcp.pop %v630
      %v633 = vmul.f32 %v627, %v631
      %v634 = vmul.f32 %v628, %v632
      %vm635 = vcmp.gt.f32.partialorder %v615, 20.0
      %vm636 = vcmp.gt.f32.partialorder %v616, 20.0
      %v637 = vmul.f32 %v615, %v633
      %v638 = vmul.f32 %v616, %v634
      %v639 = vsel %vm635, %v615, %v637
      %v640 = vsel %vm636, %v616, %v638
      %641 = vrot.lane.b32.xlu0 %v639, 17
      %v642 = vpop.permute.xlu0 %641
      %643 = vrot.lane.b32.xlu0 %v640, 17
      %v644 = vpop.permute.xlu0 %643
      %v645 = vlaneseq
      %v646 = vand.u32 %v645, 127
      %vm647 = vcmp.lt.s32.totalorder %v646, 17
      %v648 = vsel %vm647, %v642, %v644
      %v649 = vsel %vm647, %v644, %v642
      %vm650 = vcmp.ge.s32.totalorder %v509, 16
      %vm651 = vcmp.lt.s32.totalorder %v509, 272
      %vm652 = vmand %vm650, %vm651
      %vm653 = vcmp.ge.s32.totalorder %v510, 1
      %vm654 = vmand %vm652, %vm653
      %vm655 = vcmp.lt.s32.totalorder %v510, 17
      %vm656 = vmand %vm654, %vm655
      %v657 = vsel %vm656, 1, 0
      %v658 = vcvt.s32.f32 %v657
      %v660 = vlaneseq
      %v661 = vshrl.u32 %v660, 7
      %v662 = vsub.s32 0, %v661
      %v663 = vrot.slane %v658, %v662
      %v664 = vlaneseq
      %v665 = vshrl.u32 %v664, 7
      %v666 = vsub.s32 1, %v665
      %v667 = vrot.slane %v658, %v666
      %v670 = vmul.f32 %v649, %v663
      %v671 = vmul.f32 %v648, %v667
      %672 = vrot.lane.b32.xlu0 %v639, 16
      %v673 = vpop.permute.xlu0 %672
      %674 = vrot.lane.b32.xlu0 %v640, 16
      %v675 = vpop.permute.xlu0 %674
      %vm676 = vcmp.lt.s32.totalorder %v646, 16
      %v677 = vsel %vm676, %v673, %v675
      %v678 = vsel %vm676, %v675, %v673
      %vm679 = vcmp.ge.s32.totalorder %v510, 0
      %vm680 = vmand %vm652, %vm679
      %vm681 = vcmp.lt.s32.totalorder %v510, 16
      %vm682 = vmand %vm680, %vm681
      %v683 = vsel %vm682, 1, 0
      %v684 = vcvt.s32.f32 %v683
      %v686 = vlaneseq
      %v687 = vshrl.u32 %v686, 7
      %v688 = vsub.s32 0, %v687
      %v689 = vrot.slane %v684, %v688
      %v690 = vlaneseq
      %v691 = vshrl.u32 %v690, 7
      %v692 = vsub.s32 1, %v691
      %v693 = vrot.slane %v684, %v692
      %v696 = vmul.f32 %v678, %v689
      %v697 = vmul.f32 %v677, %v693
      %698 = vrot.lane.b32.xlu0 %v639, 15
      %v699 = vpop.permute.xlu0 %698
      %700 = vrot.lane.b32.xlu0 %v640, 15
      %v701 = vpop.permute.xlu0 %700
      %vm702 = vcmp.lt.s32.totalorder %v646, 15
      %v703 = vsel %vm702, %v699, %v701
      %v704 = vsel %vm702, %v701, %v699
      %vm705 = vcmp.ge.s32.totalorder %v510, 4294967295
      %vm706 = vmand %vm652, %vm705
      %vm707 = vcmp.lt.s32.totalorder %v510, 15
      %vm708 = vmand %vm706, %vm707
      %v709 = vsel %vm708, 1, 0
      %v710 = vcvt.s32.f32 %v709
      %v712 = vlaneseq
      %v713 = vshrl.u32 %v712, 7
      %v714 = vsub.s32 0, %v713
      %v715 = vrot.slane %v710, %v714
      %v716 = vlaneseq
      %v717 = vshrl.u32 %v716, 7
      %v718 = vsub.s32 1, %v717
      %v719 = vrot.slane %v710, %v718
      %v722 = vmul.f32 %v704, %v715
      %v723 = vmul.f32 %v703, %v719
      %724 = vrot.lane.b32.xlu0 %v639, 1
      %v725 = vpop.permute.xlu0 %724
      %726 = vrot.lane.b32.xlu0 %v640, 1
      %v727 = vpop.permute.xlu0 %726
      %vm728 = vcmp.lt.s32.totalorder %v646, 1
      %v729 = vsel %vm728, %v725, %v727
      %v730 = vsel %vm728, %v727, %v725
      %vm731 = vcmp.ge.s32.totalorder %v509, 0
      %vm732 = vcmp.lt.s32.totalorder %v509, 256
      %vm733 = vmand %vm731, %vm732
      %vm734 = vmand %vm733, %vm653
      %vm735 = vmand %vm734, %vm655
      %v736 = vsel %vm735, 1, 0
      %v737 = vcvt.s32.f32 %v736
      %v739 = vlaneseq
      %v740 = vshrl.u32 %v739, 7
      %v741 = vsub.s32 0, %v740
      %v742 = vrot.slane %v737, %v741
      %v743 = vlaneseq
      %v744 = vshrl.u32 %v743, 7
      %v745 = vsub.s32 1, %v744
      %v746 = vrot.slane %v737, %v745
      %v749 = vmul.f32 %v730, %v742
      %v750 = vmul.f32 %v729, %v746
      %751 = vrot.lane.b32.xlu0 %v639, 127
      %v752 = vpop.permute.xlu0 %751
      %753 = vrot.lane.b32.xlu0 %v640, 127
      %v754 = vpop.permute.xlu0 %753
      %vm755 = vcmp.lt.s32.totalorder %v646, 127
      %v756 = vsel %vm755, %v752, %v754
      %v757 = vsel %vm755, %v754, %v752
      %vm758 = vmand %vm733, %vm705
      %vm759 = vmand %vm758, %vm707
      %v760 = vsel %vm759, 1, 0
      %v761 = vcvt.s32.f32 %v760
      %v763 = vlaneseq
      %v764 = vshrl.u32 %v763, 7
      %v765 = vsub.s32 0, %v764
      %v766 = vrot.slane %v761, %v765
      %v767 = vlaneseq
      %v768 = vshrl.u32 %v767, 7
      %v769 = vsub.s32 1, %v768
      %v770 = vrot.slane %v761, %v769
      %v773 = vmul.f32 %v756, %v766
      %v774 = vmul.f32 %v757, %v770
      %775 = vrot.lane.b32.xlu0 %v639, 113
      %v776 = vpop.permute.xlu0 %775
      %777 = vrot.lane.b32.xlu0 %v640, 113
      %v778 = vpop.permute.xlu0 %777
      %vm779 = vcmp.lt.s32.totalorder %v646, 113
      %v780 = vsel %vm779, %v776, %v778
      %v781 = vsel %vm779, %v778, %v776
      %vm782 = vcmp.ge.s32.totalorder %v509, 4294967280
      %vm783 = vcmp.lt.s32.totalorder %v509, 240
      %vm784 = vmand %vm782, %vm783
      %vm785 = vmand %vm784, %vm653
      %vm786 = vmand %vm785, %vm655
      %v787 = vsel %vm786, 1, 0
      %v788 = vcvt.s32.f32 %v787
      %v790 = vlaneseq
      %v791 = vshrl.u32 %v790, 7
      %v792 = vsub.s32 0, %v791
      %v793 = vrot.slane %v788, %v792
      %v794 = vlaneseq
      %v795 = vshrl.u32 %v794, 7
      %v796 = vsub.s32 1, %v795
      %v797 = vrot.slane %v788, %v796
      %v800 = vmul.f32 %v780, %v793
      %v801 = vmul.f32 %v781, %v797
      %802 = vrot.lane.b32.xlu0 %v639, 112
      %v803 = vpop.permute.xlu0 %802
      %804 = vrot.lane.b32.xlu0 %v640, 112
      %v805 = vpop.permute.xlu0 %804
      %vm806 = vcmp.lt.s32.totalorder %v646, 112
      %v807 = vsel %vm806, %v803, %v805
      %v808 = vsel %vm806, %v805, %v803
      %vm809 = vmand %vm784, %vm679
      %vm810 = vmand %vm809, %vm681
      %v811 = vsel %vm810, 1, 0
      %v812 = vcvt.s32.f32 %v811
      %v814 = vlaneseq
      %v815 = vshrl.u32 %v814, 7
      %v816 = vsub.s32 0, %v815
      %v817 = vrot.slane %v812, %v816
      %v818 = vlaneseq
      %v819 = vshrl.u32 %v818, 7
      %v820 = vsub.s32 1, %v819
      %v821 = vrot.slane %v812, %v820
      %v824 = vmul.f32 %v807, %v817
      %v825 = vmul.f32 %v808, %v821
      %826 = vrot.lane.b32.xlu0 %v639, 111
      %v827 = vpop.permute.xlu0 %826
      %828 = vrot.lane.b32.xlu0 %v640, 111
      %v829 = vpop.permute.xlu0 %828
      %vm830 = vcmp.lt.s32.totalorder %v646, 111
      %v831 = vsel %vm830, %v827, %v829
      %v832 = vsel %vm830, %v829, %v827
      %vm833 = vmand %vm784, %vm705
      %vm834 = vmand %vm833, %vm707
      %v835 = vsel %vm834, 1, 0
      %v836 = vcvt.s32.f32 %v835
      %v838 = vlaneseq
      %v839 = vshrl.u32 %v838, 7
      %v840 = vsub.s32 0, %v839
      %v841 = vrot.slane %v836, %v840
      %v842 = vlaneseq
      %v843 = vshrl.u32 %v842, 7
      %v844 = vsub.s32 1, %v843
      %v845 = vrot.slane %v836, %v844
      %v848 = vmul.f32 %v831, %v841
      %v849 = vmul.f32 %v832, %v845
      %850 = vrot.lane.b32.xlu0 %v639, 51
      %v851 = vpop.permute.xlu0 %850
      %852 = vrot.lane.b32.xlu0 %v640, 51
      %v853 = vpop.permute.xlu0 %852
      %vm854 = vcmp.lt.s32.totalorder %v646, 51
      %v855 = vsel %vm854, %v851, %v853
      %v856 = vsel %vm854, %v853, %v851
      %vm857 = vcmp.ge.s32.totalorder %v509, 48
      %vm858 = vcmp.lt.s32.totalorder %v509, 304
      %vm859 = vmand %vm857, %vm858
      %vm860 = vcmp.ge.s32.totalorder %v510, 3
      %vm861 = vmand %vm859, %vm860
      %vm862 = vcmp.lt.s32.totalorder %v510, 19
      %vm863 = vmand %vm861, %vm862
      %v864 = vsel %vm863, 1, 0
      %v865 = vcvt.s32.f32 %v864
      %v867 = vlaneseq
      %v868 = vshrl.u32 %v867, 7
      %v869 = vsub.s32 0, %v868
      %v870 = vrot.slane %v865, %v869
      %v871 = vlaneseq
      %v872 = vshrl.u32 %v871, 7
      %v873 = vsub.s32 1, %v872
      %v874 = vrot.slane %v865, %v873
      %v877 = vmul.f32 %v856, %v870
      %v878 = vmul.f32 %v855, %v874
      %879 = vrot.lane.b32.xlu0 %v639, 48
      %v880 = vpop.permute.xlu0 %879
      %881 = vrot.lane.b32.xlu0 %v640, 48
      %v882 = vpop.permute.xlu0 %881
      %vm883 = vcmp.lt.s32.totalorder %v646, 48
      %v884 = vsel %vm883, %v880, %v882
      %v885 = vsel %vm883, %v882, %v880
      %vm886 = vmand %vm859, %vm679
      %vm887 = vmand %vm886, %vm681
      %v888 = vsel %vm887, 1, 0
      %v889 = vcvt.s32.f32 %v888
      %v891 = vlaneseq
      %v892 = vshrl.u32 %v891, 7
      %v893 = vsub.s32 0, %v892
      %v894 = vrot.slane %v889, %v893
      %v895 = vlaneseq
      %v896 = vshrl.u32 %v895, 7
      %v897 = vsub.s32 1, %v896
      %v898 = vrot.slane %v889, %v897
      %v901 = vmul.f32 %v885, %v894
      %v902 = vmul.f32 %v884, %v898
      %903 = vrot.lane.b32.xlu0 %v639, 45
      %v904 = vpop.permute.xlu0 %903
      %905 = vrot.lane.b32.xlu0 %v640, 45
      %v906 = vpop.permute.xlu0 %905
      %vm907 = vcmp.lt.s32.totalorder %v646, 45
      %v908 = vsel %vm907, %v904, %v906
      %v909 = vsel %vm907, %v906, %v904
      %vm910 = vcmp.ge.s32.totalorder %v510, 4294967293
      %vm911 = vmand %vm859, %vm910
      %vm912 = vcmp.lt.s32.totalorder %v510, 13
      %vm913 = vmand %vm911, %vm912
      %v914 = vsel %vm913, 1, 0
      %v915 = vcvt.s32.f32 %v914
      %v917 = vlaneseq
      %v918 = vshrl.u32 %v917, 7
      %v919 = vsub.s32 0, %v918
      %v920 = vrot.slane %v915, %v919
      %v921 = vlaneseq
      %v922 = vshrl.u32 %v921, 7
      %v923 = vsub.s32 1, %v922
      %v924 = vrot.slane %v915, %v923
      %v927 = vmul.f32 %v909, %v920
      %v928 = vmul.f32 %v908, %v924
      %929 = vrot.lane.b32.xlu0 %v639, 3
      %v930 = vpop.permute.xlu0 %929
      %931 = vrot.lane.b32.xlu0 %v640, 3
      %v932 = vpop.permute.xlu0 %931
      %vm933 = vcmp.lt.s32.totalorder %v646, 3
      %v934 = vsel %vm933, %v930, %v932
      %v935 = vsel %vm933, %v932, %v930
      %vm936 = vmand %vm733, %vm860
      %vm937 = vmand %vm936, %vm862
      %v938 = vsel %vm937, 1, 0
      %v939 = vcvt.s32.f32 %v938
      %v941 = vlaneseq
      %v942 = vshrl.u32 %v941, 7
      %v943 = vsub.s32 0, %v942
      %v944 = vrot.slane %v939, %v943
      %v945 = vlaneseq
      %v946 = vshrl.u32 %v945, 7
      %v947 = vsub.s32 1, %v946
      %v948 = vrot.slane %v939, %v947
      %v951 = vmul.f32 %v935, %v944
      %v952 = vmul.f32 %v934, %v948
      %953 = vrot.lane.b32.xlu0 %v639, 125
      %v954 = vpop.permute.xlu0 %953
      %955 = vrot.lane.b32.xlu0 %v640, 125
      %v956 = vpop.permute.xlu0 %955
      %vm957 = vcmp.lt.s32.totalorder %v646, 125
      %v958 = vsel %vm957, %v954, %v956
      %v959 = vsel %vm957, %v956, %v954
      %vm960 = vmand %vm733, %vm910
      %vm961 = vmand %vm960, %vm912
      %v962 = vsel %vm961, 1, 0
      %v963 = vcvt.s32.f32 %v962
      %v965 = vlaneseq
      %v966 = vshrl.u32 %v965, 7
      %v967 = vsub.s32 0, %v966
      %v968 = vrot.slane %v963, %v967
      %v969 = vlaneseq
      %v970 = vshrl.u32 %v969, 7
      %v971 = vsub.s32 1, %v970
      %v972 = vrot.slane %v963, %v971
      %v975 = vmul.f32 %v958, %v968
      %v976 = vmul.f32 %v959, %v972
      %977 = vrot.lane.b32.xlu0 %v639, 83
      %v978 = vpop.permute.xlu0 %977
      %979 = vrot.lane.b32.xlu0 %v640, 83
      %v980 = vpop.permute.xlu0 %979
      %vm981 = vcmp.lt.s32.totalorder %v646, 83
      %v982 = vsel %vm981, %v978, %v980
      %v983 = vsel %vm981, %v980, %v978
      %vm984 = vcmp.ge.s32.totalorder %v509, 4294967248
      %vm985 = vcmp.lt.s32.totalorder %v509, 208
      %vm986 = vmand %vm984, %vm985
      %vm987 = vmand %vm986, %vm860
      %vm988 = vmand %vm987, %vm862
      %v989 = vsel %vm988, 1, 0
      %v990 = vcvt.s32.f32 %v989
      %v992 = vlaneseq
      %v993 = vshrl.u32 %v992, 7
      %v994 = vsub.s32 0, %v993
      %v995 = vrot.slane %v990, %v994
      %v996 = vlaneseq
      %v997 = vshrl.u32 %v996, 7
      %v998 = vsub.s32 1, %v997
      %v999 = vrot.slane %v990, %v998
      %v1002 = vmul.f32 %v982, %v995
      %v1003 = vmul.f32 %v983, %v999
      %1004 = vrot.lane.b32.xlu0 %v639, 80
      %v1005 = vpop.permute.xlu0 %1004
      %1006 = vrot.lane.b32.xlu0 %v640, 80
      %v1007 = vpop.permute.xlu0 %1006
      %vm1008 = vcmp.lt.s32.totalorder %v646, 80
      %v1009 = vsel %vm1008, %v1005, %v1007
      %v1010 = vsel %vm1008, %v1007, %v1005
      %vm1011 = vmand %vm986, %vm679
      %vm1012 = vmand %vm1011, %vm681
      %v1013 = vsel %vm1012, 1, 0
      %v1014 = vcvt.s32.f32 %v1013
      %v1016 = vlaneseq
      %v1017 = vshrl.u32 %v1016, 7
      %v1018 = vsub.s32 0, %v1017
      %v1019 = vrot.slane %v1014, %v1018
      %v1020 = vlaneseq
      %v1021 = vshrl.u32 %v1020, 7
      %v1022 = vsub.s32 1, %v1021
      %v1023 = vrot.slane %v1014, %v1022
      %v1026 = vmul.f32 %v1009, %v1019
      %v1027 = vmul.f32 %v1010, %v1023
      %1028 = vrot.lane.b32.xlu0 %v639, 77
      %v1029 = vpop.permute.xlu0 %1028
      %1030 = vrot.lane.b32.xlu0 %v640, 77
      %v1031 = vpop.permute.xlu0 %1030
      %vm1032 = vcmp.lt.s32.totalorder %v646, 77
      %v1033 = vsel %vm1032, %v1029, %v1031
      %v1034 = vsel %vm1032, %v1031, %v1029
      %vm1035 = vmand %vm986, %vm910
      %vm1036 = vmand %vm1035, %vm912
      %v1037 = vsel %vm1036, 1, 0
      %v1038 = vcvt.s32.f32 %v1037
      %v1040 = vlaneseq
      %v1041 = vshrl.u32 %v1040, 7
      %v1042 = vsub.s32 0, %v1041
      %v1043 = vrot.slane %v1038, %v1042
      %v1044 = vlaneseq
      %v1045 = vshrl.u32 %v1044, 7
      %v1046 = vsub.s32 1, %v1045
      %v1047 = vrot.slane %v1038, %v1046
      %v1050 = vmul.f32 %v1033, %v1043
      %v1051 = vmul.f32 %v1034, %v1047
      %v1052 = vld [vmem:[%s7] sm:$0xff]
      %v1053 = vld [vmem:[%s7 + $0x8] sm:$0xff]
      %v1054 = vld [vmem:[%s8] sm:$0xff]
      %v1055 = vld [vmem:[%s8 + $0x8] sm:$0xff]
      %1057 = vset.pattern.permute.xlu0 0
      %1058 = vperm.xlu0 %1057, %v1054
      %v1059 = vpop.permute.xlu0 %1058
      %1062 = vset.pattern.permute.xlu0 0
      %1063 = vperm.xlu0 %1062, %v1055
      %v1064 = vpop.permute.xlu0 %1063
      %vm1066 = vcmask 588800
      %v1068 = vsel %vm1066, %v1052, 0
      %v1071 = vsel %vm1066, %v1053, 0
      %1073 = vmatprep.subr.mxu0 %v671
      %1074 = vmatpush1.msra.mxu0 %v670
      %1075 = vmatprep.subr.mxu0 %v697
      %1076 = vmatpush1.msra.mxu0 %v696
      %1077 = vmatprep.subr.mxu0 %v723
      %1078 = vmatpush1.msra.mxu0 %v722
      %1079 = vmatprep.subr.mxu0 %v750
      %1080 = vmatpush1.msra.mxu0 %v749
      %1081 = vmatprep.subr.mxu0 %v640
      %1082 = vmatpush1.msra.mxu0 %v639
      %1083 = vmatprep.subr.mxu0 %v774
      %1084 = vmatpush1.msra.mxu0 %v773
      %1085 = vmatprep.subr.mxu0 %v801
      %1086 = vmatpush1.msra.mxu0 %v800
      %1087 = vmatprep.subr.mxu0 %v825
      %1088 = vmatpush1.msra.mxu0 %v824
      %1089 = vmatprep.subr.mxu0 %v849
      %1090 = vmatpush1.msra.mxu0 %v848
      %1091 = vmatprep.subr.mxu0 0.0
      %1092 = vmatpush1.msra.mxu0 0.0
      %1093 = vmatprep.subr.mxu0 0.0
      %1094 = vmatpush1.msra.mxu0 0.0
      %1095 = vmatprep.subr.mxu0 0.0
      %1096 = vmatpush1.msra.mxu0 0.0
      %1097 = vmatprep.subr.mxu0 0.0
      %1098 = vmatpush1.msra.mxu0 0.0
      %1099 = vmatprep.subr.mxu0 0.0
      %1100 = vmatpush1.msra.mxu0 0.0
      %1101 = vmatprep.subr.mxu0 0.0
      %1102 = vmatpush1.msra.mxu0 0.0
      %1103 = vmatprep.subr.mxu0 0.0
      %1104 = vmatpush1.msra.mxu0 0.0
      %1105 = vmatprep.subr.mxu0 0.0
      %1106 = vmatpush1.msra.mxu0 0.0
      %1107 = vmatprep.subr.mxu0 0.0
      %1108 = vmatpush1.msra.mxu0 0.0
      %1109 = vmatprep.subr.mxu0 0.0
      %1110 = vmatpush1.msra.mxu0 0.0
      %1111 = vmatprep.subr.mxu0 0.0
      %1112 = vmatpush1.msra.mxu0 0.0
      %1113 = vmatprep.subr.mxu0 0.0
      %1114 = vmatpush1.msra.mxu0 0.0
      %1115 = vmatprep.subr.mxu0 0.0
      %1116 = vmatpush1.msra.mxu0 0.0
      %1117 = vmatprep.subr.mxu0 0.0
      %1118 = vmatpush1.msra.mxu0 0.0
      %1119 = vmatprep.subr.mxu0 0.0
      %1120 = vmatpush1.msra.mxu0 0.0
      %1121 = vmatprep.subr.mxu0 0.0
      %1122 = vmatpush1.msra.mxu0 0.0
      %1123 = vmatprep.subr.mxu0 0.0
      %1124 = vmatpush1.msra.mxu0 0.0
      %1125 = vmatprep.subr.mxu0 0.0
      %1126 = vmatpush1.msra.mxu0 0.0
      %1127 = vmatprep.subr.mxu0 0.0
      %1128 = vmatpush1.msra.mxu0 0.0
      %1129 = vmatprep.subr.mxu0 0.0
      %1130 = vmatpush1.msra.mxu0 0.0
      %1131 = vmatprep.subr.mxu0 0.0
      %1132 = vmatpush1.msra.mxu0 0.0
      %1133 = vmatprep.subr.mxu0 0.0
      %1134 = vmatpush1.msra.mxu0 0.0
      %1135 = vmatprep.subr.mxu0 0.0
      %1136 = vmatpush1.msra.mxu0 0.0
      %1137 = vmatprep.mubr.f32.mxu0 0.0
      %1138 = vmatmul.mubr.f32.gmra.mrb[0].mxu0 %v1068
      %v1139 = vpop.f32.mrb[0].mxu0
      %v1140 = vadd.f32 %v1059, %v1139
      %v1141 = vpop.f32.mrb[0].mxu0
      %v1142 = vadd.f32 %v1059, %v1141
      %1143 = vmatprep.mubr.f32.mxu0 0.0
      %1144 = vmatmul.mubr.f32.gmra.mrb[0].mxu0 %v1071
      %v1145 = vpop.f32.mrb[0].mxu0
      %v1146 = vadd.f32 %v1064, %v1145
      %v1147 = vpop.f32.mrb[0].mxu0
      %v1148 = vadd.f32 %v1064, %v1147
      %1149 = vdwg.mxu0
      %v1150 = vld [vmem:[%s9] sm:$0xff]
      %v1151 = vld [vmem:[%s10] sm:$0xff]
      %1153 = vset.pattern.permute.xlu0 0
      %1154 = vperm.xlu0 %1153, %v1151
      %v1155 = vpop.permute.xlu0 %1154
      %v1158 = vsel %vm1066, %v1150, 0
      %1160 = vmatprep.subr.mxu0 %v878
      %1161 = vmatpush1.msra.mxu0 %v877
      %1162 = vmatprep.subr.mxu0 %v902
      %1163 = vmatpush1.msra.mxu0 %v901
      %1164 = vmatprep.subr.mxu0 %v928
      %1165 = vmatpush1.msra.mxu0 %v927
      %1166 = vmatprep.subr.mxu0 %v952
      %1167 = vmatpush1.msra.mxu0 %v951
      %1168 = vmatprep.subr.mxu0 %v640
      %1169 = vmatpush1.msra.mxu0 %v639
      %1170 = vmatprep.subr.mxu0 %v976
      %1171 = vmatpush1.msra.mxu0 %v975
      %1172 = vmatprep.subr.mxu0 %v1003
      %1173 = vmatpush1.msra.mxu0 %v1002
      %1174 = vmatprep.subr.mxu0 %v1027
      %1175 = vmatpush1.msra.mxu0 %v1026
      %1176 = vmatprep.subr.mxu0 %v1051
      %1177 = vmatpush1.msra.mxu0 %v1050
      %1178 = vmatprep.subr.mxu0 0.0
      %1179 = vmatpush1.msra.mxu0 0.0
      %1180 = vmatprep.subr.mxu0 0.0
      %1181 = vmatpush1.msra.mxu0 0.0
      %1182 = vmatprep.subr.mxu0 0.0
      %1183 = vmatpush1.msra.mxu0 0.0
      %1184 = vmatprep.subr.mxu0 0.0
      %1185 = vmatpush1.msra.mxu0 0.0
      %1186 = vmatprep.subr.mxu0 0.0
      %1187 = vmatpush1.msra.mxu0 0.0
      %1188 = vmatprep.subr.mxu0 0.0
      %1189 = vmatpush1.msra.mxu0 0.0
      %1190 = vmatprep.subr.mxu0 0.0
      %1191 = vmatpush1.msra.mxu0 0.0
      %1192 = vmatprep.subr.mxu0 0.0
      %1193 = vmatpush1.msra.mxu0 0.0
      %1194 = vmatprep.subr.mxu0 0.0
      %1195 = vmatpush1.msra.mxu0 0.0
      %1196 = vmatprep.subr.mxu0 0.0
      %1197 = vmatpush1.msra.mxu0 0.0
      %1198 = vmatprep.subr.mxu0 0.0
      %1199 = vmatpush1.msra.mxu0 0.0
      %1200 = vmatprep.subr.mxu0 0.0
      %1201 = vmatpush1.msra.mxu0 0.0
      %1202 = vmatprep.subr.mxu0 0.0
      %1203 = vmatpush1.msra.mxu0 0.0
      %1204 = vmatprep.subr.mxu0 0.0
      %1205 = vmatpush1.msra.mxu0 0.0
      %1206 = vmatprep.subr.mxu0 0.0
      %1207 = vmatpush1.msra.mxu0 0.0
      %1208 = vmatprep.subr.mxu0 0.0
      %1209 = vmatpush1.msra.mxu0 0.0
      %1210 = vmatprep.subr.mxu0 0.0
      %1211 = vmatpush1.msra.mxu0 0.0
      %1212 = vmatprep.subr.mxu0 0.0
      %1213 = vmatpush1.msra.mxu0 0.0
      %1214 = vmatprep.subr.mxu0 0.0
      %1215 = vmatpush1.msra.mxu0 0.0
      %1216 = vmatprep.subr.mxu0 0.0
      %1217 = vmatpush1.msra.mxu0 0.0
      %1218 = vmatprep.subr.mxu0 0.0
      %1219 = vmatpush1.msra.mxu0 0.0
      %1220 = vmatprep.subr.mxu0 0.0
      %1221 = vmatpush1.msra.mxu0 0.0
      %1222 = vmatprep.subr.mxu0 0.0
      %1223 = vmatpush1.msra.mxu0 0.0
      %1224 = vmatprep.mubr.f32.mxu0 0.0
      %1225 = vmatmul.mubr.f32.gmra.mrb[0].mxu0 %v1158
      %v1226 = vpop.f32.mrb[0].mxu0
      %v1227 = vadd.f32 %v1155, %v1226
      %v1228 = vpop.f32.mrb[0].mxu0
      %v1229 = vadd.f32 %v1155, %v1228
      %1230 = vdwg.mxu0
      %v1231 = vld [vmem:[%s11] sm:$0xff]
      %vm1232 = vcmask 261120
      %v1234 = vsel %vm1232, %v1231, 0
      %1236 = vmatprep.subr.mxu0 %v599
      %1237 = vmatpush1.msra.mxu0 %v597
      %1238 = vmatprep.subr.mxu0 %v1142
      %1239 = vmatpush1.msra.mxu0 %v1140
      %1240 = vmatprep.subr.mxu0 %v1148
      %1241 = vmatpush1.msra.mxu0 %v1146
      %1242 = vmatprep.subr.mxu0 %v1229
      %1243 = vmatpush1.msra.mxu0 %v1227
      %1244 = vmatprep.subr.mxu0 0.0
      %1245 = vmatpush1.msra.mxu0 0.0
      %1246 = vmatprep.subr.mxu0 0.0
      %1247 = vmatpush1.msra.mxu0 0.0
      %1248 = vmatprep.subr.mxu0 0.0
      %1249 = vmatpush1.msra.mxu0 0.0
      %1250 = vmatprep.subr.mxu0 0.0
      %1251 = vmatpush1.msra.mxu0 0.0
      %1252 = vmatprep.subr.mxu0 0.0
      %1253 = vmatpush1.msra.mxu0 0.0
      %1254 = vmatprep.subr.mxu0 0.0
      %1255 = vmatpush1.msra.mxu0 0.0
      %1256 = vmatprep.subr.mxu0 0.0
      %1257 = vmatpush1.msra.mxu0 0.0
      %1258 = vmatprep.subr.mxu0 0.0
      %1259 = vmatpush1.msra.mxu0 0.0
      %1260 = vmatprep.subr.mxu0 0.0
      %1261 = vmatpush1.msra.mxu0 0.0
      %1262 = vmatprep.subr.mxu0 0.0
      %1263 = vmatpush1.msra.mxu0 0.0
      %1264 = vmatprep.subr.mxu0 0.0
      %1265 = vmatpush1.msra.mxu0 0.0
      %1266 = vmatprep.subr.mxu0 0.0
      %1267 = vmatpush1.msra.mxu0 0.0
      %1268 = vmatprep.subr.mxu0 0.0
      %1269 = vmatpush1.msra.mxu0 0.0
      %1270 = vmatprep.subr.mxu0 0.0
      %1271 = vmatpush1.msra.mxu0 0.0
      %1272 = vmatprep.subr.mxu0 0.0
      %1273 = vmatpush1.msra.mxu0 0.0
      %1274 = vmatprep.subr.mxu0 0.0
      %1275 = vmatpush1.msra.mxu0 0.0
      %1276 = vmatprep.subr.mxu0 0.0
      %1277 = vmatpush1.msra.mxu0 0.0
      %1278 = vmatprep.subr.mxu0 0.0
      %1279 = vmatpush1.msra.mxu0 0.0
      %1280 = vmatprep.subr.mxu0 0.0
      %1281 = vmatpush1.msra.mxu0 0.0
      %1282 = vmatprep.subr.mxu0 0.0
      %1283 = vmatpush1.msra.mxu0 0.0
      %1284 = vmatprep.subr.mxu0 0.0
      %1285 = vmatpush1.msra.mxu0 0.0
      %1286 = vmatprep.subr.mxu0 0.0
      %1287 = vmatpush1.msra.mxu0 0.0
      %1288 = vmatprep.subr.mxu0 0.0
      %1289 = vmatpush1.msra.mxu0 0.0
      %1290 = vmatprep.subr.mxu0 0.0
      %1291 = vmatpush1.msra.mxu0 0.0
      %1292 = vmatprep.subr.mxu0 0.0
      %1293 = vmatpush1.msra.mxu0 0.0
      %1294 = vmatprep.subr.mxu0 0.0
      %1295 = vmatpush1.msra.mxu0 0.0
      %1296 = vmatprep.subr.mxu0 0.0
      %1297 = vmatpush1.msra.mxu0 0.0
      %1298 = vmatprep.subr.mxu0 0.0
      %1299 = vmatpush1.msra.mxu0 0.0
      %1300 = vmatprep.mubr.f32.mxu0 0.0
      %1301 = vmatmul.mubr.f32.gmra.mrb[0].mxu0 %v1234
      %v1302 = vpop.f32.mrb[0].mxu0
      %v1303 = vadd.f32 0.0, %v1302
      %v1304 = vpop.f32.mrb[0].mxu0
      %v1305 = vadd.f32 0.0, %v1304
      %1306 = vdwg.mxu0
      %v1307 = vld [vmem:[%s12] sm:$0xff]
      %1309 = vset.pattern.permute.xlu0 0
      %1310 = vperm.xlu0 %1309, %v1307
      %v1311 = vpop.permute.xlu0 %1310
      %v1313 = vmul.f32 %v1303, %v1311
      %v1314 = vmul.f32 %v1305, %v1311
      %v1315 = vld [vmem:[%s13] sm:$0xff]
      %1317 = vset.pattern.permute.xlu0 0
      %1318 = vperm.xlu0 %1317, %v1315
      %v1319 = vpop.permute.xlu0 %1318
      %v1321 = vadd.f32 %v1313, %v1319
      %v1322 = vadd.f32 %v1314, %v1319
      %v1323 = vmin.f32 %v1321, 20.0
      %v1324 = vmin.f32 %v1322, 20.0
      %v1325 = vmul.f32 %v1323, 1.442695
      %v1326 = vpow.pop %v1325
      %v1327 = vmul.f32 %v1324, 1.442695
      %v1328 = vpow.pop %v1327
      %v1329 = vadd.f32 %v1326, 1.0
      %v1330 = vadd.f32 %v1328, 1.0
      %v1331 = vmul.f32 %v1329, %v1329
      %v1332 = vmul.f32 %v1330, %v1330
      %v1333 = vsub.f32 %v1331, 1.0
      %v1334 = vsub.f32 %v1332, 1.0
      %v1335 = vadd.f32 %v1331, 1.0
      %v1336 = vadd.f32 %v1332, 1.0
      %v1337 = vrcp.pop %v1335
      %v1338 = vrcp.pop %v1336
      %v1339 = vmul.f32 %v1333, %v1337
      %v1340 = vmul.f32 %v1334, %v1338
      %vm1341 = vcmp.gt.f32.partialorder %v1321, 20.0
      %vm1342 = vcmp.gt.f32.partialorder %v1322, 20.0
      %v1343 = vmul.f32 %v1321, %v1339
      %v1344 = vmul.f32 %v1322, %v1340
      %v1345 = vsel %vm1341, %v1321, %v1343
      %v1346 = vsel %vm1342, %v1322, %v1344
      %1347 = vst [vmem:[%s507] sm:$0xff] %v1345
      %1348 = vst [vmem:[%s507 + $0x8] sm:$0xff] %v1346
      %s1349 = smul.u32 2, %s25
      %p1350 = scmp.lt.s32.totalorder %s1349, 3
      %s1351 = scalar_select %p1350, %s1349, 3
      %s1352 = smul.addr %s1351, 8
      %s1353 = scalar_lea.vmem %s14, %s1352
      // Predicated region
      $region77: #{conv_block_forward.1} parent=75 // pred_check
        %p1354 = pneg %p352
      $region78: #{conv_block_forward.1} parent=75 // pred_check_branch
        %1356 = sbr.rel (%p1354) target = $region80
      $region79: #{conv_block_forward.1} parent=75 // pred_region
        %s1357 = smul.u32 2, %s25
      $region80: #{conv_block_forward.1} parent=75 // pred_fallthru
        _
    $region76: #{conv_block_forward.1} parent=5 // pred_fallthru
      _
    %p1358 = scmp.le.s32.totalorder 2, %s20
    // Predicated region
    $region81: #{conv_block_forward.1} parent=5 // pred_check
      %p1359 = pneg %p1358
    $region82: #{conv_block_forward.1} parent=5 // pred_check_branch
      %1361 = sbr.rel (%p1359) target = $region84
    $region83: #{conv_block_forward.1} parent=5 // pred_region
      %s1362 = ssub.s32 %s20, 2
      // Predicated region
      $region85: #{conv_block_forward.1} parent=83 // pred_check
        %p1363 = pneg %p358
      $region86: #{conv_block_forward.1} parent=83 // pred_check_branch
        %1365 = sbr.rel (%p1363) target = $region88
      $region87: #{conv_block_forward.1} parent=83 // pred_region
        %s1366 = smul.u32 2, %s26
        %p1367 = scmp.lt.s32.totalorder %s1366, 3
        %s1368 = scalar_select %p1367, %s1366, 3
        %s1369 = smul.addr %s1368, 8
        %s1370 = scalar_lea.vmem %s14, %s1369
      $region88: #{conv_block_forward.1} parent=83 // pred_fallthru
        _
    $region84: #{conv_block_forward.1} parent=5 // pred_fallthru
      _
  $region6: #{conv_block_forward.1} parent=0 // loop_footer
    %s24 = sadd.s32 1, %s20
  $region7: #{conv_block_forward.1} parent=0 // loop_footer_branch
    %19 = sbr.rel target = $region3
  $region8: #{conv_block_forward.1} parent=0 // loop_exit
    _

</llo_original>
